<compile_context>
chip_gen: v7x
topology: tpu7x:2x2x1
jax: 0.10.0
libtpu: 0.0.40
codegen_flags: <defaults>
</compile_context>

<pallas_src>
import math

import jax
import jax.numpy as jnp
from jax.experimental import pallas as pl
from jax.experimental.pallas import tpu as pltpu

# ----------------------------- config (small, deterministic) -----------------
BATCH = 2
SEQ = 8
D_MODEL = 32
HEADS = 4
D_HEAD = D_MODEL // HEADS
LINEAR_UNITS = 64
LN_EPS = 1e-5
NEG_INF = -1e9
ATTN_SCALE = 1.0 / math.sqrt(D_HEAD)
VEC_W = 128                                   # bias/LN slab padded to a full lane tile

# Column layout of the fused bf16 weight slab (rows = D_MODEL).
_W_QKV = 0                                    # (D, 3D)
_W_O = _W_QKV + 3 * D_MODEL                   # 96   (D, D)
_W_1 = _W_O + D_MODEL                         # 128  (D, LINEAR_UNITS)
_W_2A = _W_1 + LINEAR_UNITS                   # 192  (D, D)  = W2[:D, :]
_W_2B = _W_2A + D_MODEL                       # 224  (D, D)  = W2[D:, :]
_W_END = _W_2B + D_MODEL                      # 256

assert LINEAR_UNITS == 2 * D_MODEL, "W2 row-split packing assumes linear_units == 2*d_model"


def _layernorm(v, gamma, beta, eps=LN_EPS):
    mu = jnp.mean(v, axis=-1, keepdims=True)
    var = jnp.mean((v - mu) ** 2, axis=-1, keepdims=True)
    return (v - mu) * jax.lax.rsqrt(var + eps) * gamma + beta


def encoder_layer_kernel(x_ref, mask_ref, w_ref, vec_ref, out_ref):
    BT, D = x_ref.shape
    B = mask_ref.shape[0] // 2
    T = BT // B
    DH = D // HEADS

    x = x_ref[...]                                   # (B*T, D) f32

    # Host-precomputed mask rows: [0:B] = additive key bias, [B:2B] = keep mult.
    bias3 = mask_ref[0:B]                            # (B, 1, T)
    keep3 = mask_ref[B:2 * B]                        # (B, 1, T)
    # Hoisted out of the head loop (JAX does not CSE broadcast_in_dim).
    bias_b = jnp.broadcast_to(bias3, (B, T, T))
    keep_b = jnp.broadcast_to(keep3, (B, T, T))

    # Packed bias / LayerNorm vectors; full (8, 128) f32 tile, slices at lane 0.
    vec = vec_ref[...]
    bqkv = vec[0:1, :3 * D]
    bo = vec[1:2, :D]
    g1 = vec[2:3, :D]
    be1 = vec[3:4, :D]
    b1 = vec[4:5, :LINEAR_UNITS]
    b2 = vec[5:6, :D]
    g2 = vec[6:7, :D]
    be2 = vec[7:8, :D]

    # ---- fused QKV projection: one MXU matmul, bf16 operands, f32 accumulate -
    xb = x.astype(jnp.bfloat16)
    qkv = jnp.dot(xb, w_ref[:, _W_QKV:_W_O],
                  preferred_element_type=jnp.float32) + bqkv
    qkv_b = qkv.astype(jnp.bfloat16).reshape(B, T, 3 * D)   # leading-dim split only

    # ---- multi-head self-attention --------------------------------------------
    # Per-head output projection is accumulated directly (no lane-dim concat of
    # the per-head contexts); heads stay in the lane dim (no (B,T,H,Dh) relayout).
    attn = jnp.zeros((BT, D), jnp.float32)
    for h in range(HEADS):                           # static, tiny head count
        qh = qkv_b[:, :, h * DH:(h + 1) * DH]
        kh = qkv_b[:, :, D + h * DH:D + (h + 1) * DH]
        vh = qkv_b[:, :, 2 * D + h * DH:2 * D + (h + 1) * DH]
        s = jnp.einsum("bqd,bkd->bqk", qh, kh,
                       preferred_element_type=jnp.float32) * ATTN_SCALE + bias_b
        m = jnp.max(s, axis=-1, keepdims=True)
        e = jnp.exp(s - m)
        p = e * pl.reciprocal(jnp.sum(e, axis=-1, keepdims=True), approx=True)
        p = p * keep_b                               # zero masked attn weights
        ctx_h = jnp.einsum("bqk,bkd->bqd", p.astype(jnp.bfloat16), vh,
                           preferred_element_type=jnp.float32)          # (B,T,DH)
        attn = attn + jnp.dot(
            ctx_h.reshape(BT, DH).astype(jnp.bfloat16),
            w_ref[h * DH:(h + 1) * DH, _W_O:_W_1],
            preferred_element_type=jnp.float32)

    # residual + norm1 (dropout1 identity in eval mode)
    x1 = _layernorm(x + attn + bo, g1, be1)

    # ---- position-wise feed forward -------------------------------------------
    h1 = jnp.dot(x1.astype(jnp.bfloat16), w_ref[:, _W_1:_W_2A],
                 preferred_element_type=jnp.float32) + b1
    h1 = jnp.maximum(h1, 0.0).astype(jnp.bfloat16)   # ReLU
    # W2 stored row-split into two (D, D) chunks inside the single weight slab.
    ff = (jnp.dot(h1[:, :D], w_ref[:, _W_2A:_W_2B],
                  preferred_element_type=jnp.float32)
          + jnp.dot(h1[:, D:2 * D], w_ref[:, _W_2B:_W_END],
                    preferred_element_type=jnp.float32)
          + b2)

    # residual + norm2 (dropout2 identity in eval mode)
    x2 = _layernorm(x1 + ff, g2, be2)
    out_ref[...] = x2.astype(out_ref.dtype)


def _pack_params(p):
    """Host-side, one-time packing of the module parameters for the kernel."""
    wqkv = jnp.concatenate([p["wq"], p["wk"], p["wv"]], axis=1)          # (D, 3D)
    w2a = p["w2"][:D_MODEL, :]                                           # (D, D)
    w2b = p["w2"][D_MODEL:, :]                                           # (D, D)
    w_slab = jnp.concatenate([wqkv, p["wo"], p["w1"], w2a, w2b],
                             axis=1).astype(jnp.bfloat16)                # (D, 256)

    bqkv = jnp.concatenate([p["bq"], p["bk"], p["bv"]], axis=1)          # (1, 3D)

    def row(v):
        v = v.reshape(1, -1).astype(jnp.float32)
        return jnp.pad(v, ((0, 0), (0, VEC_W - v.shape[1])))

    vec = jnp.concatenate(
        [row(bqkv), row(p["bo"]), row(p["g1"]), row(p["be1"]),
         row(p["b1"]), row(p["b2"]), row(p["g2"]), row(p["be2"])],
        axis=0)                                                          # (8, 128)
    return w_slab, vec


def transformer_encoder_layer(x, mask, params):
    """x: (B, T, D) float32; mask: (B, T) (1 keep / 0 masked). Returns (y, mask)."""
    B, T, D = x.shape
    x_flat = x.reshape(B * T, D).astype(jnp.float32)

    # Precompute both mask forms on the host; pack into one tiny input.
    keep = mask.reshape(B, 1, T).astype(jnp.float32)
    bias = jnp.where(keep > 0, 0.0, NEG_INF)
    maskpack = jnp.concatenate([bias, keep], axis=0)                     # (2B, 1, T)

    w_slab, vec = _pack_params(params)
    args = (x_flat, maskpack, w_slab, vec)

    def full_spec(a):
        nd = a.ndim
        return pl.BlockSpec(a.shape, lambda i, _nd=nd: (0,) * _nd)

    # NOTE: single grid step, batch folded into the row dim; per the review,
    # the real lever at this size is batching more rows per pallas_call
    # (stacked layers / bigger batch), not in-kernel tiling.
    out_flat = pl.pallas_call(
        encoder_layer_kernel,
        out_shape=jax.ShapeDtypeStruct((B * T, D), jnp.float32),
        grid_spec=pltpu.PrefetchScalarGridSpec(
            num_scalar_prefetch=0,
            grid=(1,),
            in_specs=[full_spec(a) for a in args],
            out_specs=pl.BlockSpec((B * T, D), lambda i: (0, 0)),
        ),
        compiler_params=pltpu.CompilerParams(
            dimension_semantics=("arbitrary",)),
    )(*args)
    return out_flat.reshape(B, T, D).astype(x.dtype), mask


def init_params(key):
    ks = jax.random.split(key, 12)
    scale = 0.05

    def lin(k, n_in, n_out):
        return scale * jax.random.normal(k, (n_in, n_out), jnp.float32)

    return {
        "wq": lin(ks[0], D_MODEL, D_MODEL),
        "bq": scale * jax.random.normal(ks[1], (1, D_MODEL), jnp.float32),
        "wk": lin(ks[2], D_MODEL, D_MODEL),
        "bk": scale * jax.random.normal(ks[3], (1, D_MODEL), jnp.float32),
        "wv": lin(ks[4], D_MODEL, D_MODEL),
        "bv": scale * jax.random.normal(ks[5], (1, D_MODEL), jnp.float32),
        "wo": lin(ks[6], D_MODEL, D_MODEL),
        "bo": scale * jax.random.normal(ks[7], (1, D_MODEL), jnp.float32),
        "g1": jnp.ones((1, D_MODEL), jnp.float32),
        "be1": jnp.zeros((1, D_MODEL), jnp.float32),
        "w1": lin(ks[8], D_MODEL, LINEAR_UNITS),
        "b1": scale * jax.random.normal(ks[9], (1, LINEAR_UNITS), jnp.float32),
        "w2": lin(ks[10], LINEAR_UNITS, D_MODEL),
        "b2": scale * jax.random.normal(ks[11], (1, D_MODEL), jnp.float32),
        "g2": jnp.ones((1, D_MODEL), jnp.float32),
        "be2": jnp.zeros((1, D_MODEL), jnp.float32),
    }


def reference_forward(x, mask, p, emulate_bf16=False):
    """Pure-JAX reference of the PyTorch forward (eval mode).

    With emulate_bf16=True, matmul operands are rounded to bf16 (f32 accumulate)
    to mirror the kernel's MXU precision for a tight numerical check.
    """
    B, T, D = x.shape

    def c(a):
        return a.astype(jnp.bfloat16) if emulate_bf16 else a

    def mm(a, b):
        return jnp.dot(c(a), c(b), preferred_element_type=jnp.float32)

    m = mask.reshape(B, 1, 1, T)
    q = (mm(x, p["wq"]) + p["bq"]).reshape(B, T, HEADS, D_HEAD).transpose(0, 2, 1, 3)
    k = (mm(x, p["wk"]) + p["bk"]).reshape(B, T, HEADS, D_HEAD).transpose(0, 2, 1, 3)
    v = (mm(x, p["wv"]) + p["bv"]).reshape(B, T, HEADS, D_HEAD).transpose(0, 2, 1, 3)
    s = jnp.einsum("bhqd,bhkd->bhqk", c(q), c(k),
                   preferred_element_type=jnp.float32) / math.sqrt(D_HEAD)
    s = jnp.where(m > 0, s, NEG_INF)
    a = jax.nn.softmax(s, axis=-1)
    a = jnp.where(m > 0, a, 0.0)
    ctx = jnp.einsum("bhqk,bhkd->bhqd", c(a), c(v),
                     preferred_element_type=jnp.float32)
    ctx = ctx.transpose(0, 2, 1, 3).reshape(B, T, D)
    attn = mm(ctx, p["wo"]) + p["bo"]

    def ln(v_, g, b):
        mu = v_.mean(-1, keepdims=True)
        var = ((v_ - mu) ** 2).mean(-1, keepdims=True)
        return (v_ - mu) * jax.lax.rsqrt(var + LN_EPS) * g + b

    x1 = ln(x + attn, p["g1"], p["be1"])
    ff = mm(jnp.maximum(mm(x1, p["w1"]) + p["b1"], 0.0), p["w2"]) + p["b2"]
    x2 = ln(x1 + ff, p["g2"], p["be2"])
    return x2


if __name__ == "__main__":
    key = jax.random.PRNGKey(0)
    k_x, k_p = jax.random.split(key)

    x = jax.random.normal(k_x, (BATCH, SEQ, D_MODEL), jnp.float32)
    # mask: last two key positions of batch 1 are masked out
    mask = jnp.ones((BATCH, SEQ), jnp.float32)
    mask = mask.at[1, -2:].set(0.0)

    params = init_params(k_p)

    out, out_mask = transformer_encoder_layer(x, mask, params)
    out = jax.block_until_ready(out)

    # Tight check vs. a reference that mirrors the kernel's bf16 MXU operands.
    ref_bf16 = reference_forward(x, mask, params, emulate_bf16=True)
    err_b = jnp.max(jnp.abs(out - ref_bf16))
    assert jnp.allclose(out, ref_bf16, atol=5e-3, rtol=5e-3), (
        f"max abs err vs bf16-emulated ref {err_b}")

    # Loose check vs. the exact f32 PyTorch-semantics reference.
    ref_f32 = reference_forward(x, mask, params, emulate_bf16=False)
    err_f = jnp.max(jnp.abs(out - ref_f32))
    assert jnp.allclose(out, ref_f32, atol=3e-2, rtol=3e-2), (
        f"max abs err vs f32 ref {err_f}")

    print("KERNEL_OK")
</pallas_src>

<mosaic_0001>
module attributes {stable_mosaic.version = 11 : i64} {
  func.func @encoder_layer_kernel(%arg0: i32, %arg1: memref<16x32xf32, #tpu.memory_space<vmem>>, %arg2: memref<4x1x8xf32, #tpu.memory_space<vmem>>, %arg3: memref<32x256xbf16, #tpu.memory_space<vmem>>, %arg4: memref<8x128xf32, #tpu.memory_space<vmem>>, %arg5: memref<16x32xf32, #tpu.memory_space<vmem>>) attributes {dimension_semantics = [#tpu.dimension_semantics<arbitrary>], iteration_bounds = array<i64: 1>, scalar_prefetch = 0 : i64, scratch_operands = 0 : i64, tpu.core_type = #tpu.core_type<tc>, window_params = [{pipeline_mode = #tpu.pipeline_mode<synchronous>, transform_indices = @transform_0, window_bounds = array<i64: 16, 32>}, {pipeline_mode = #tpu.pipeline_mode<synchronous>, transform_indices = @transform_1, window_bounds = array<i64: 4, 1, 8>}, {pipeline_mode = #tpu.pipeline_mode<synchronous>, transform_indices = @transform_2, window_bounds = array<i64: 32, 256>}, {pipeline_mode = #tpu.pipeline_mode<synchronous>, transform_indices = @transform_3, window_bounds = array<i64: 8, 128>}, {pipeline_mode = #tpu.pipeline_mode<synchronous>, transform_indices = @transform_4, window_bounds = array<i64: 16, 32>}]} {
    %c0 = arith.constant 0 : index
    %c0_0 = arith.constant 0 : index
    %0 = vector.load %arg1[%c0, %c0_0] : memref<16x32xf32, #tpu.memory_space<vmem>>, vector<16x32xf32>
    %c0_1 = arith.constant 0 : index
    %c0_2 = arith.constant 0 : index
    %c0_3 = arith.constant 0 : index
    %1 = vector.load %arg2[%c0_1, %c0_2, %c0_3] : memref<4x1x8xf32, #tpu.memory_space<vmem>>, vector<2x1x8xf32>
    %c2 = arith.constant 2 : index
    %c0_4 = arith.constant 0 : index
    %c0_5 = arith.constant 0 : index
    %2 = vector.load %arg2[%c2, %c0_4, %c0_5] : memref<4x1x8xf32, #tpu.memory_space<vmem>>, vector<2x1x8xf32>
    %3 = vector.shape_cast %1 : vector<2x1x8xf32> to vector<2x1x8xf32>
    %4 = vector.broadcast %3 : vector<2x1x8xf32> to vector<2x8x8xf32>
    %5 = vector.shape_cast %2 : vector<2x1x8xf32> to vector<2x1x8xf32>
    %6 = vector.broadcast %5 : vector<2x1x8xf32> to vector<2x8x8xf32>
    %c0_6 = arith.constant 0 : index
    %c0_7 = arith.constant 0 : index
    %7 = vector.load %arg4[%c0_6, %c0_7] : memref<8x128xf32, #tpu.memory_space<vmem>>, vector<8x128xf32>
    %8 = vector.extract_strided_slice %7 {offsets = [0, 0], sizes = [1, 96], strides = [1, 1]} : vector<8x128xf32> to vector<1x96xf32>
    %9 = vector.extract_strided_slice %7 {offsets = [1, 0], sizes = [1, 32], strides = [1, 1]} : vector<8x128xf32> to vector<1x32xf32>
    %10 = vector.extract_strided_slice %7 {offsets = [2, 0], sizes = [1, 32], strides = [1, 1]} : vector<8x128xf32> to vector<1x32xf32>
    %11 = vector.extract_strided_slice %7 {offsets = [3, 0], sizes = [1, 32], strides = [1, 1]} : vector<8x128xf32> to vector<1x32xf32>
    %12 = vector.extract_strided_slice %7 {offsets = [4, 0], sizes = [1, 64], strides = [1, 1]} : vector<8x128xf32> to vector<1x64xf32>
    %13 = vector.extract_strided_slice %7 {offsets = [5, 0], sizes = [1, 32], strides = [1, 1]} : vector<8x128xf32> to vector<1x32xf32>
    %14 = vector.extract_strided_slice %7 {offsets = [6, 0], sizes = [1, 32], strides = [1, 1]} : vector<8x128xf32> to vector<1x32xf32>
    %15 = vector.extract_strided_slice %7 {offsets = [7, 0], sizes = [1, 32], strides = [1, 1]} : vector<8x128xf32> to vector<1x32xf32>
    %16 = arith.truncf %0 : vector<16x32xf32> to vector<16x32xbf16>
    %c0_8 = arith.constant 0 : index
    %c0_9 = arith.constant 0 : index
    %17 = vector.load %arg3[%c0_8, %c0_9] : memref<32x256xbf16, #tpu.memory_space<vmem>>, vector<32x96xbf16>
    %cst = arith.constant dense<0.000000e+00> : vector<16x96xf32>
    %18 = tpu.matmul %16, %17, %cst {dimension_numbers = #tpu.dot_dimension_numbers<[1], [0], [0], [1], [0, 0, 1, 1], [], []>} : vector<16x32xbf16>, vector<32x96xbf16>, vector<16x96xf32> -> vector<16x96xf32>
    %19 = vector.broadcast %8 : vector<1x96xf32> to vector<16x96xf32>
    %20 = arith.addf %18, %19 : vector<16x96xf32>
    %21 = arith.truncf %20 : vector<16x96xf32> to vector<16x96xbf16>
    %22 = vector.shape_cast %21 : vector<16x96xbf16> to vector<2x8x96xbf16>
    %cst_10 = arith.constant 0.000000e+00 : f32
    %23 = vector.broadcast %cst_10 : f32 to vector<16x32xf32>
    %24 = vector.extract_strided_slice %22 {offsets = [0, 0, 0], sizes = [2, 8, 8], strides = [1, 1, 1]} : vector<2x8x96xbf16> to vector<2x8x8xbf16>
    %25 = vector.extract_strided_slice %22 {offsets = [0, 0, 32], sizes = [2, 8, 8], strides = [1, 1, 1]} : vector<2x8x96xbf16> to vector<2x8x8xbf16>
    %26 = vector.extract_strided_slice %22 {offsets = [0, 0, 64], sizes = [2, 8, 8], strides = [1, 1, 1]} : vector<2x8x96xbf16> to vector<2x8x8xbf16>
    "tpu.trace_start"() <{level = 10 : i32, message = "bqd,bkd->bqk"}> : () -> ()
    %cst_11 = arith.constant dense<0.000000e+00> : vector<2x8x8xf32>
    %27 = tpu.matmul %24, %25, %cst_11 {dimension_numbers = #tpu.dot_dimension_numbers<[2], [2], [1], [1], [0, 0, 0, 1, 1, 1], [0], [0]>} : vector<2x8x8xbf16>, vector<2x8x8xbf16>, vector<2x8x8xf32> -> vector<2x8x8xf32>
    "tpu.trace_stop"() : () -> ()
    %cst_12 = arith.constant 0.353553385 : f32
    %28 = vector.broadcast %cst_12 : f32 to vector<2x8x8xf32>
    %29 = arith.mulf %27, %28 : vector<2x8x8xf32>
    %30 = arith.addf %29, %4 : vector<2x8x8xf32>
    %cst_13 = arith.constant dense<0xFF800000> : vector<2x8xf32>
    %31 = vector.multi_reduction <maximumf>, %30, %cst_13 [2] : vector<2x8x8xf32> to vector<2x8xf32>
    %32 = vector.shape_cast %31 : vector<2x8xf32> to vector<2x8x1xf32>
    %33 = vector.broadcast %32 : vector<2x8x1xf32> to vector<2x8x8xf32>
    %34 = arith.subf %30, %33 : vector<2x8x8xf32>
    %35 = math.exp %34 : vector<2x8x8xf32>
    %cst_14 = arith.constant dense<0.000000e+00> : vector<2x8xf32>
    %36 = vector.multi_reduction <add>, %35, %cst_14 [2] : vector<2x8x8xf32> to vector<2x8xf32>
    %37 = vector.shape_cast %36 : vector<2x8xf32> to vector<2x8x1xf32>
    %38 = tpu.reciprocal %37 {approx = true} : vector<2x8x1xf32> -> vector<2x8x1xf32>
    %39 = vector.broadcast %38 : vector<2x8x1xf32> to vector<2x8x8xf32>
    %40 = arith.mulf %35, %39 : vector<2x8x8xf32>
    %41 = arith.mulf %40, %6 : vector<2x8x8xf32>
    %42 = arith.truncf %41 : vector<2x8x8xf32> to vector<2x8x8xbf16>
    "tpu.trace_start"() <{level = 10 : i32, message = "bqk,bkd->bqd"}> : () -> ()
    %cst_15 = arith.constant dense<0.000000e+00> : vector<2x8x8xf32>
    %43 = tpu.matmul %42, %26, %cst_15 {dimension_numbers = #tpu.dot_dimension_numbers<[2], [1], [1], [2], [0, 0, 0, 1, 1, 2], [0], [0]>} : vector<2x8x8xbf16>, vector<2x8x8xbf16>, vector<2x8x8xf32> -> vector<2x8x8xf32>
    "tpu.trace_stop"() : () -> ()
    %44 = vector.shape_cast %43 : vector<2x8x8xf32> to vector<16x8xf32>
    %45 = arith.truncf %44 : vector<16x8xf32> to vector<16x8xbf16>
    %c0_16 = arith.constant 0 : index
    %c96 = arith.constant 96 : index
    %46 = vector.load %arg3[%c0_16, %c96] : memref<32x256xbf16, #tpu.memory_space<vmem>>, vector<8x32xbf16>
    %cst_17 = arith.constant dense<0.000000e+00> : vector<16x32xf32>
    %47 = tpu.matmul %45, %46, %cst_17 {dimension_numbers = #tpu.dot_dimension_numbers<[1], [0], [0], [1], [0, 0, 1, 1], [], []>} : vector<16x8xbf16>, vector<8x32xbf16>, vector<16x32xf32> -> vector<16x32xf32>
    %48 = arith.addf %23, %47 : vector<16x32xf32>
    %49 = vector.extract_strided_slice %22 {offsets = [0, 0, 8], sizes = [2, 8, 8], strides = [1, 1, 1]} : vector<2x8x96xbf16> to vector<2x8x8xbf16>
    %50 = vector.extract_strided_slice %22 {offsets = [0, 0, 40], sizes = [2, 8, 8], strides = [1, 1, 1]} : vector<2x8x96xbf16> to vector<2x8x8xbf16>
    %51 = vector.extract_strided_slice %22 {offsets = [0, 0, 72], sizes = [2, 8, 8], strides = [1, 1, 1]} : vector<2x8x96xbf16> to vector<2x8x8xbf16>
    "tpu.trace_start"() <{level = 10 : i32, message = "bqd,bkd->bqk"}> : () -> ()
    %cst_18 = arith.constant dense<0.000000e+00> : vector<2x8x8xf32>
    %52 = tpu.matmul %49, %50, %cst_18 {dimension_numbers = #tpu.dot_dimension_numbers<[2], [2], [1], [1], [0, 0, 0, 1, 1, 1], [0], [0]>} : vector<2x8x8xbf16>, vector<2x8x8xbf16>, vector<2x8x8xf32> -> vector<2x8x8xf32>
    "tpu.trace_stop"() : () -> ()
    %cst_19 = arith.constant 0.353553385 : f32
    %53 = vector.broadcast %cst_19 : f32 to vector<2x8x8xf32>
    %54 = arith.mulf %52, %53 : vector<2x8x8xf32>
    %55 = arith.addf %54, %4 : vector<2x8x8xf32>
    %cst_20 = arith.constant dense<0xFF800000> : vector<2x8xf32>
    %56 = vector.multi_reduction <maximumf>, %55, %cst_20 [2] : vector<2x8x8xf32> to vector<2x8xf32>
    %57 = vector.shape_cast %56 : vector<2x8xf32> to vector<2x8x1xf32>
    %58 = vector.broadcast %57 : vector<2x8x1xf32> to vector<2x8x8xf32>
    %59 = arith.subf %55, %58 : vector<2x8x8xf32>
    %60 = math.exp %59 : vector<2x8x8xf32>
    %cst_21 = arith.constant dense<0.000000e+00> : vector<2x8xf32>
    %61 = vector.multi_reduction <add>, %60, %cst_21 [2] : vector<2x8x8xf32> to vector<2x8xf32>
    %62 = vector.shape_cast %61 : vector<2x8xf32> to vector<2x8x1xf32>
    %63 = tpu.reciprocal %62 {approx = true} : vector<2x8x1xf32> -> vector<2x8x1xf32>
    %64 = vector.broadcast %63 : vector<2x8x1xf32> to vector<2x8x8xf32>
    %65 = arith.mulf %60, %64 : vector<2x8x8xf32>
    %66 = arith.mulf %65, %6 : vector<2x8x8xf32>
    %67 = arith.truncf %66 : vector<2x8x8xf32> to vector<2x8x8xbf16>
    "tpu.trace_start"() <{level = 10 : i32, message = "bqk,bkd->bqd"}> : () -> ()
    %cst_22 = arith.constant dense<0.000000e+00> : vector<2x8x8xf32>
    %68 = tpu.matmul %67, %51, %cst_22 {dimension_numbers = #tpu.dot_dimension_numbers<[2], [1], [1], [2], [0, 0, 0, 1, 1, 2], [0], [0]>} : vector<2x8x8xbf16>, vector<2x8x8xbf16>, vector<2x8x8xf32> -> vector<2x8x8xf32>
    "tpu.trace_stop"() : () -> ()
    %69 = vector.shape_cast %68 : vector<2x8x8xf32> to vector<16x8xf32>
    %70 = arith.truncf %69 : vector<16x8xf32> to vector<16x8xbf16>
    %c8 = arith.constant 8 : index
    %c96_23 = arith.constant 96 : index
    %71 = vector.load %arg3[%c8, %c96_23] : memref<32x256xbf16, #tpu.memory_space<vmem>>, vector<8x32xbf16>
    %cst_24 = arith.constant dense<0.000000e+00> : vector<16x32xf32>
    %72 = tpu.matmul %70, %71, %cst_24 {dimension_numbers = #tpu.dot_dimension_numbers<[1], [0], [0], [1], [0, 0, 1, 1], [], []>} : vector<16x8xbf16>, vector<8x32xbf16>, vector<16x32xf32> -> vector<16x32xf32>
    %73 = arith.addf %48, %72 : vector<16x32xf32>
    %74 = vector.extract_strided_slice %22 {offsets = [0, 0, 16], sizes = [2, 8, 8], strides = [1, 1, 1]} : vector<2x8x96xbf16> to vector<2x8x8xbf16>
    %75 = vector.extract_strided_slice %22 {offsets = [0, 0, 48], sizes = [2, 8, 8], strides = [1, 1, 1]} : vector<2x8x96xbf16> to vector<2x8x8xbf16>
    %76 = vector.extract_strided_slice %22 {offsets = [0, 0, 80], sizes = [2, 8, 8], strides = [1, 1, 1]} : vector<2x8x96xbf16> to vector<2x8x8xbf16>
    "tpu.trace_start"() <{level = 10 : i32, message = "bqd,bkd->bqk"}> : () -> ()
    %cst_25 = arith.constant dense<0.000000e+00> : vector<2x8x8xf32>
    %77 = tpu.matmul %74, %75, %cst_25 {dimension_numbers = #tpu.dot_dimension_numbers<[2], [2], [1], [1], [0, 0, 0, 1, 1, 1], [0], [0]>} : vector<2x8x8xbf16>, vector<2x8x8xbf16>, vector<2x8x8xf32> -> vector<2x8x8xf32>
    "tpu.trace_stop"() : () -> ()
    %cst_26 = arith.constant 0.353553385 : f32
    %78 = vector.broadcast %cst_26 : f32 to vector<2x8x8xf32>
    %79 = arith.mulf %77, %78 : vector<2x8x8xf32>
    %80 = arith.addf %79, %4 : vector<2x8x8xf32>
    %cst_27 = arith.constant dense<0xFF800000> : vector<2x8xf32>
    %81 = vector.multi_reduction <maximumf>, %80, %cst_27 [2] : vector<2x8x8xf32> to vector<2x8xf32>
    %82 = vector.shape_cast %81 : vector<2x8xf32> to vector<2x8x1xf32>
    %83 = vector.broadcast %82 : vector<2x8x1xf32> to vector<2x8x8xf32>
    %84 = arith.subf %80, %83 : vector<2x8x8xf32>
    %85 = math.exp %84 : vector<2x8x8xf32>
    %cst_28 = arith.constant dense<0.000000e+00> : vector<2x8xf32>
    %86 = vector.multi_reduction <add>, %85, %cst_28 [2] : vector<2x8x8xf32> to vector<2x8xf32>
    %87 = vector.shape_cast %86 : vector<2x8xf32> to vector<2x8x1xf32>
    %88 = tpu.reciprocal %87 {approx = true} : vector<2x8x1xf32> -> vector<2x8x1xf32>
    %89 = vector.broadcast %88 : vector<2x8x1xf32> to vector<2x8x8xf32>
    %90 = arith.mulf %85, %89 : vector<2x8x8xf32>
    %91 = arith.mulf %90, %6 : vector<2x8x8xf32>
    %92 = arith.truncf %91 : vector<2x8x8xf32> to vector<2x8x8xbf16>
    "tpu.trace_start"() <{level = 10 : i32, message = "bqk,bkd->bqd"}> : () -> ()
    %cst_29 = arith.constant dense<0.000000e+00> : vector<2x8x8xf32>
    %93 = tpu.matmul %92, %76, %cst_29 {dimension_numbers = #tpu.dot_dimension_numbers<[2], [1], [1], [2], [0, 0, 0, 1, 1, 2], [0], [0]>} : vector<2x8x8xbf16>, vector<2x8x8xbf16>, vector<2x8x8xf32> -> vector<2x8x8xf32>
    "tpu.trace_stop"() : () -> ()
    %94 = vector.shape_cast %93 : vector<2x8x8xf32> to vector<16x8xf32>
    %95 = arith.truncf %94 : vector<16x8xf32> to vector<16x8xbf16>
    %c16 = arith.constant 16 : index
    %c96_30 = arith.constant 96 : index
    %96 = vector.load %arg3[%c16, %c96_30] : memref<32x256xbf16, #tpu.memory_space<vmem>>, vector<8x32xbf16>
    %cst_31 = arith.constant dense<0.000000e+00> : vector<16x32xf32>
    %97 = tpu.matmul %95, %96, %cst_31 {dimension_numbers = #tpu.dot_dimension_numbers<[1], [0], [0], [1], [0, 0, 1, 1], [], []>} : vector<16x8xbf16>, vector<8x32xbf16>, vector<16x32xf32> -> vector<16x32xf32>
    %98 = arith.addf %73, %97 : vector<16x32xf32>
    %99 = vector.extract_strided_slice %22 {offsets = [0, 0, 24], sizes = [2, 8, 8], strides = [1, 1, 1]} : vector<2x8x96xbf16> to vector<2x8x8xbf16>
    %100 = vector.extract_strided_slice %22 {offsets = [0, 0, 56], sizes = [2, 8, 8], strides = [1, 1, 1]} : vector<2x8x96xbf16> to vector<2x8x8xbf16>
    %101 = vector.extract_strided_slice %22 {offsets = [0, 0, 88], sizes = [2, 8, 8], strides = [1, 1, 1]} : vector<2x8x96xbf16> to vector<2x8x8xbf16>
    "tpu.trace_start"() <{level = 10 : i32, message = "bqd,bkd->bqk"}> : () -> ()
    %cst_32 = arith.constant dense<0.000000e+00> : vector<2x8x8xf32>
    %102 = tpu.matmul %99, %100, %cst_32 {dimension_numbers = #tpu.dot_dimension_numbers<[2], [2], [1], [1], [0, 0, 0, 1, 1, 1], [0], [0]>} : vector<2x8x8xbf16>, vector<2x8x8xbf16>, vector<2x8x8xf32> -> vector<2x8x8xf32>
    "tpu.trace_stop"() : () -> ()
    %cst_33 = arith.constant 0.353553385 : f32
    %103 = vector.broadcast %cst_33 : f32 to vector<2x8x8xf32>
    %104 = arith.mulf %102, %103 : vector<2x8x8xf32>
    %105 = arith.addf %104, %4 : vector<2x8x8xf32>
    %cst_34 = arith.constant dense<0xFF800000> : vector<2x8xf32>
    %106 = vector.multi_reduction <maximumf>, %105, %cst_34 [2] : vector<2x8x8xf32> to vector<2x8xf32>
    %107 = vector.shape_cast %106 : vector<2x8xf32> to vector<2x8x1xf32>
    %108 = vector.broadcast %107 : vector<2x8x1xf32> to vector<2x8x8xf32>
    %109 = arith.subf %105, %108 : vector<2x8x8xf32>
    %110 = math.exp %109 : vector<2x8x8xf32>
    %cst_35 = arith.constant dense<0.000000e+00> : vector<2x8xf32>
    %111 = vector.multi_reduction <add>, %110, %cst_35 [2] : vector<2x8x8xf32> to vector<2x8xf32>
    %112 = vector.shape_cast %111 : vector<2x8xf32> to vector<2x8x1xf32>
    %113 = tpu.reciprocal %112 {approx = true} : vector<2x8x1xf32> -> vector<2x8x1xf32>
    %114 = vector.broadcast %113 : vector<2x8x1xf32> to vector<2x8x8xf32>
    %115 = arith.mulf %110, %114 : vector<2x8x8xf32>
    %116 = arith.mulf %115, %6 : vector<2x8x8xf32>
    %117 = arith.truncf %116 : vector<2x8x8xf32> to vector<2x8x8xbf16>
    "tpu.trace_start"() <{level = 10 : i32, message = "bqk,bkd->bqd"}> : () -> ()
    %cst_36 = arith.constant dense<0.000000e+00> : vector<2x8x8xf32>
    %118 = tpu.matmul %117, %101, %cst_36 {dimension_numbers = #tpu.dot_dimension_numbers<[2], [1], [1], [2], [0, 0, 0, 1, 1, 2], [0], [0]>} : vector<2x8x8xbf16>, vector<2x8x8xbf16>, vector<2x8x8xf32> -> vector<2x8x8xf32>
    "tpu.trace_stop"() : () -> ()
    %119 = vector.shape_cast %118 : vector<2x8x8xf32> to vector<16x8xf32>
    %120 = arith.truncf %119 : vector<16x8xf32> to vector<16x8xbf16>
    %c24 = arith.constant 24 : index
    %c96_37 = arith.constant 96 : index
    %121 = vector.load %arg3[%c24, %c96_37] : memref<32x256xbf16, #tpu.memory_space<vmem>>, vector<8x32xbf16>
    %cst_38 = arith.constant dense<0.000000e+00> : vector<16x32xf32>
    %122 = tpu.matmul %120, %121, %cst_38 {dimension_numbers = #tpu.dot_dimension_numbers<[1], [0], [0], [1], [0, 0, 1, 1], [], []>} : vector<16x8xbf16>, vector<8x32xbf16>, vector<16x32xf32> -> vector<16x32xf32>
    %123 = arith.addf %98, %122 : vector<16x32xf32>
    %124 = arith.addf %0, %123 : vector<16x32xf32>
    %125 = vector.broadcast %9 : vector<1x32xf32> to vector<16x32xf32>
    %126 = arith.addf %124, %125 : vector<16x32xf32>
    %cst_39 = arith.constant dense<0.000000e+00> : vector<16xf32>
    %127 = vector.multi_reduction <add>, %126, %cst_39 [1] : vector<16x32xf32> to vector<16xf32>
    %128 = vector.shape_cast %127 : vector<16xf32> to vector<16x1xf32>
    %cst_40 = arith.constant 3.200000e+01 : f32
    %129 = vector.broadcast %cst_40 : f32 to vector<16x1xf32>
    %130 = arith.divf %128, %129 : vector<16x1xf32>
    %131 = vector.broadcast %130 : vector<16x1xf32> to vector<16x32xf32>
    %132 = arith.subf %126, %131 : vector<16x32xf32>
    %133 = arith.mulf %132, %132 : vector<16x32xf32>
    %cst_41 = arith.constant dense<0.000000e+00> : vector<16xf32>
    %134 = vector.multi_reduction <add>, %133, %cst_41 [1] : vector<16x32xf32> to vector<16xf32>
    %135 = vector.shape_cast %134 : vector<16xf32> to vector<16x1xf32>
    %cst_42 = arith.constant 3.200000e+01 : f32
    %136 = vector.broadcast %cst_42 : f32 to vector<16x1xf32>
    %137 = arith.divf %135, %136 : vector<16x1xf32>
    %138 = vector.broadcast %130 : vector<16x1xf32> to vector<16x32xf32>
    %139 = arith.subf %126, %138 : vector<16x32xf32>
    %cst_43 = arith.constant 9.99999974E-6 : f32
    %140 = vector.broadcast %cst_43 : f32 to vector<16x1xf32>
    %141 = arith.addf %137, %140 : vector<16x1xf32>
    %142 = math.rsqrt %141 : vector<16x1xf32>
    %143 = vector.broadcast %142 : vector<16x1xf32> to vector<16x32xf32>
    %144 = arith.mulf %139, %143 : vector<16x32xf32>
    %145 = vector.broadcast %10 : vector<1x32xf32> to vector<16x32xf32>
    %146 = arith.mulf %144, %145 : vector<16x32xf32>
    %147 = vector.broadcast %11 : vector<1x32xf32> to vector<16x32xf32>
    %148 = arith.addf %146, %147 : vector<16x32xf32>
    %149 = arith.truncf %148 : vector<16x32xf32> to vector<16x32xbf16>
    %c0_44 = arith.constant 0 : index
    %c128 = arith.constant 128 : index
    %150 = vector.load %arg3[%c0_44, %c128] : memref<32x256xbf16, #tpu.memory_space<vmem>>, vector<32x64xbf16>
    %cst_45 = arith.constant dense<0.000000e+00> : vector<16x64xf32>
    %151 = tpu.matmul %149, %150, %cst_45 {dimension_numbers = #tpu.dot_dimension_numbers<[1], [0], [0], [1], [0, 0, 1, 1], [], []>} : vector<16x32xbf16>, vector<32x64xbf16>, vector<16x64xf32> -> vector<16x64xf32>
    %152 = vector.broadcast %12 : vector<1x64xf32> to vector<16x64xf32>
    %153 = arith.addf %151, %152 : vector<16x64xf32>
    %cst_46 = arith.constant 0.000000e+00 : f32
    %154 = vector.broadcast %cst_46 : f32 to vector<16x64xf32>
    %155 = arith.maximumf %153, %154 : vector<16x64xf32>
    %156 = arith.truncf %155 : vector<16x64xf32> to vector<16x64xbf16>
    %157 = vector.extract_strided_slice %156 {offsets = [0, 0], sizes = [16, 32], strides = [1, 1]} : vector<16x64xbf16> to vector<16x32xbf16>
    %c0_47 = arith.constant 0 : index
    %c192 = arith.constant 192 : index
    %158 = vector.load %arg3[%c0_47, %c192] : memref<32x256xbf16, #tpu.memory_space<vmem>>, vector<32x32xbf16>
    %cst_48 = arith.constant dense<0.000000e+00> : vector<16x32xf32>
    %159 = tpu.matmul %157, %158, %cst_48 {dimension_numbers = #tpu.dot_dimension_numbers<[1], [0], [0], [1], [0, 0, 1, 1], [], []>} : vector<16x32xbf16>, vector<32x32xbf16>, vector<16x32xf32> -> vector<16x32xf32>
    %160 = vector.extract_strided_slice %156 {offsets = [0, 32], sizes = [16, 32], strides = [1, 1]} : vector<16x64xbf16> to vector<16x32xbf16>
    %c0_49 = arith.constant 0 : index
    %c224 = arith.constant 224 : index
    %161 = vector.load %arg3[%c0_49, %c224] : memref<32x256xbf16, #tpu.memory_space<vmem>>, vector<32x32xbf16>
    %cst_50 = arith.constant dense<0.000000e+00> : vector<16x32xf32>
    %162 = tpu.matmul %160, %161, %cst_50 {dimension_numbers = #tpu.dot_dimension_numbers<[1], [0], [0], [1], [0, 0, 1, 1], [], []>} : vector<16x32xbf16>, vector<32x32xbf16>, vector<16x32xf32> -> vector<16x32xf32>
    %163 = arith.addf %159, %162 : vector<16x32xf32>
    %164 = vector.broadcast %13 : vector<1x32xf32> to vector<16x32xf32>
    %165 = arith.addf %163, %164 : vector<16x32xf32>
    %166 = arith.addf %148, %165 : vector<16x32xf32>
    %cst_51 = arith.constant dense<0.000000e+00> : vector<16xf32>
    %167 = vector.multi_reduction <add>, %166, %cst_51 [1] : vector<16x32xf32> to vector<16xf32>
    %168 = vector.shape_cast %167 : vector<16xf32> to vector<16x1xf32>
    %cst_52 = arith.constant 3.200000e+01 : f32
    %169 = vector.broadcast %cst_52 : f32 to vector<16x1xf32>
    %170 = arith.divf %168, %169 : vector<16x1xf32>
    %171 = vector.broadcast %170 : vector<16x1xf32> to vector<16x32xf32>
    %172 = arith.subf %166, %171 : vector<16x32xf32>
    %173 = arith.mulf %172, %172 : vector<16x32xf32>
    %cst_53 = arith.constant dense<0.000000e+00> : vector<16xf32>
    %174 = vector.multi_reduction <add>, %173, %cst_53 [1] : vector<16x32xf32> to vector<16xf32>
    %175 = vector.shape_cast %174 : vector<16xf32> to vector<16x1xf32>
    %cst_54 = arith.constant 3.200000e+01 : f32
    %176 = vector.broadcast %cst_54 : f32 to vector<16x1xf32>
    %177 = arith.divf %175, %176 : vector<16x1xf32>
    %178 = vector.broadcast %170 : vector<16x1xf32> to vector<16x32xf32>
    %179 = arith.subf %166, %178 : vector<16x32xf32>
    %cst_55 = arith.constant 9.99999974E-6 : f32
    %180 = vector.broadcast %cst_55 : f32 to vector<16x1xf32>
    %181 = arith.addf %177, %180 : vector<16x1xf32>
    %182 = math.rsqrt %181 : vector<16x1xf32>
    %183 = vector.broadcast %182 : vector<16x1xf32> to vector<16x32xf32>
    %184 = arith.mulf %179, %183 : vector<16x32xf32>
    %185 = vector.broadcast %14 : vector<1x32xf32> to vector<16x32xf32>
    %186 = arith.mulf %184, %185 : vector<16x32xf32>
    %187 = vector.broadcast %15 : vector<1x32xf32> to vector<16x32xf32>
    %188 = arith.addf %186, %187 : vector<16x32xf32>
    %c0_56 = arith.constant 0 : index
    %c0_57 = arith.constant 0 : index
    %189 = vector.load %arg5[%c0_56, %c0_57] : memref<16x32xf32, #tpu.memory_space<vmem>>, vector<16x32xf32>
    tpu.vector_store %arg5[%c0_56, %c0_57], %188 {strides = array<i32>} : memref<16x32xf32, #tpu.memory_space<vmem>>, vector<16x32xf32>,
    return
  }
  func.func @transform_0(%arg0: i32) -> (i32, i32) {
    %c0_i32 = arith.constant 0 : i32
    %c0_i32_0 = arith.constant 0 : i32
    %c0_i32_1 = arith.constant 0 : i32
    return %c0_i32, %c0_i32_0 : i32, i32
  }
  func.func @transform_1(%arg0: i32) -> (i32, i32, i32) {
    %c0_i32 = arith.constant 0 : i32
    %c0_i32_0 = arith.constant 0 : i32
    %c0_i32_1 = arith.constant 0 : i32
    %c0_i32_2 = arith.constant 0 : i32
    return %c0_i32, %c0_i32_0, %c0_i32_1 : i32, i32, i32
  }
  func.func @transform_2(%arg0: i32) -> (i32, i32) {
    %c0_i32 = arith.constant 0 : i32
    %c0_i32_0 = arith.constant 0 : i32
    %c0_i32_1 = arith.constant 0 : i32
    return %c0_i32, %c0_i32_0 : i32, i32
  }
  func.func @transform_3(%arg0: i32) -> (i32, i32) {
    %c0_i32 = arith.constant 0 : i32
    %c0_i32_0 = arith.constant 0 : i32
    %c0_i32_1 = arith.constant 0 : i32
    return %c0_i32, %c0_i32_0 : i32, i32
  }
  func.func @transform_4(%arg0: i32) -> (i32, i32) {
    %c0_i32 = arith.constant 0 : i32
    %c0_i32_0 = arith.constant 0 : i32
    %c0_i32_1 = arith.constant 0 : i32
    return %c0_i32, %c0_i32_0 : i32, i32
  }
}

</mosaic_0001>

<llo_original>
// kernel: tpu_custom_call.1
$region0: #{tpu_custom_call.1}
  #allocation0 [shape = 'u32[]', space=smem, size = 0x4, offset = 0x4, fixed_abs, tag = 'smem constant byte address 0x4 - core index']
  #allocation1 [shape = 'u32[144,128]{1,0:T(1,128)}', space=vmem, size = 0x12000, scoped, tag = 'internal scratch']
  %s0 = inlined_call_operand.hbm [shape: f32[16,32], index: 0, kind: input, shape index: {}]
  %s1 = inlined_call_operand.hbm [shape: f32[4,1,8], index: 1, kind: input, shape index: {}]
  %s2 = inlined_call_operand.hbm [shape: bf16[32,256], index: 2, kind: input, shape index: {}]
  %s3 = inlined_call_operand.vmem [shape: f32[8,128], index: 3, kind: input, shape index: {}]
  %s4 = inlined_call_operand.hbm [shape: f32[16,32], index: 4, kind: output, shape index: {}]
  %s5 = sld [smem:[#allocation0]]
  $region38: #{tpu_custom_call.1} parent=0
    _
  %s7 = ssub.s32 1, %s5
  %s8 = scalar_select 0, %s7, %s5
  $region1: #{tpu_custom_call.1} parent=0
    #allocation2 [shape = 'u8[8192]{0}', space=vmem, size = 0x2000, scoped, tag = 'input window, operand 0, single buffered']
    #allocation3 [shape = 's32[1]{0}', space=sflag, size = 0x4, scoped, tag = 'scoped memory for tpu_custom_call.1']
    #allocation4 [shape = 's32[1]{0}', space=sflag, size = 0x4, scoped, tag = 'scoped memory for tpu_custom_call.1']
    #allocation5 [shape = 'u8[2048]{0}', space=vmem, size = 0x800, scoped, tag = 'input window, operand 1, single buffered']
    #allocation6 [shape = 's32[1]{0}', space=sflag, size = 0x4, scoped, tag = 'scoped memory for tpu_custom_call.1']
    #allocation7 [shape = 'u8[16384]{0}', space=vmem, size = 0x4000, scoped, tag = 'input window, operand 2, single buffered']
    #allocation8 [shape = 'u8[8192]{0}', space=vmem, size = 0x2000, scoped, tag = 'output window, operand 0, single buffered']
    %9 = vsyncpa [#allocation3], 0
    %10 = vsyncpa [#allocation6], 0
    %11 = vsyncpa [#allocation4], 0
    // Predicated region
    $region2: #{tpu_custom_call.1} parent=1 // pred_check
      _
    $region3: #{tpu_custom_call.1} parent=1 // pred_check_branch
      %13 = sbr.rel (0) target = $region5
    $region4: #{tpu_custom_call.1} parent=1 // pred_region
      %s15 = ssub.s32 256, 256
      %16 = vsyncadd [#allocation3], %s15
      %s17 = sshll.u32 [#allocation2], 4
      %s18 = int_to_ptr.vmem [resolvable:$true] %s17
      %23 = dma.hbm_to_vmem [thread:$0]  %s0, 256, %s18, [#allocation3], 128, 128, 8
    $region5: #{tpu_custom_call.1} parent=1 // pred_fallthru
      _
    // Predicated region
    $region6: #{tpu_custom_call.1} parent=1 // pred_check
      _
    $region7: #{tpu_custom_call.1} parent=1 // pred_check_branch
      %25 = sbr.rel (0) target = $region9
    $region8: #{tpu_custom_call.1} parent=1 // pred_region
      %s27 = ssub.s32 64, 64
      %28 = vsyncadd [#allocation6], %s27
      %s29 = sshll.u32 [#allocation5], 4
      %s30 = int_to_ptr.vmem [resolvable:$true] %s29
      %35 = dma.hbm_to_vmem [thread:$0]  %s1, 64, %s30, [#allocation6], 16, 16, 1
    $region9: #{tpu_custom_call.1} parent=1 // pred_fallthru
      _
    // Predicated region
    $region10: #{tpu_custom_call.1} parent=1 // pred_check
      _
    $region11: #{tpu_custom_call.1} parent=1 // pred_check_branch
      %37 = sbr.rel (0) target = $region13
    $region12: #{tpu_custom_call.1} parent=1 // pred_region
      %s39 = ssub.s32 512, 512
      %40 = vsyncadd [#allocation6], %s39
      %s41 = sshll.u32 [#allocation7], 4
      %s42 = int_to_ptr.vmem [resolvable:$true] %s41
      %47 = dma.hbm_to_vmem [thread:$0]  %s2, 512, %s42, [#allocation6], 128, 128, 8
    $region13: #{tpu_custom_call.1} parent=1 // pred_fallthru
      _
    // Predicated region
    $region14: #{tpu_custom_call.1} parent=1 // pred_check
      _
    $region15: #{tpu_custom_call.1} parent=1 // pred_check_branch
      %49 = sbr.rel (0) target = $region17
    $region16: #{tpu_custom_call.1} parent=1 // pred_region
      _
    $region17: #{tpu_custom_call.1} parent=1 // pred_fallthru
      _
    // Predicated region
    $region18: #{tpu_custom_call.1} parent=1 // pred_check
      _
    $region19: #{tpu_custom_call.1} parent=1 // pred_check_branch
      %51 = sbr.rel (0) target = $region21
    $region20: #{tpu_custom_call.1} parent=1 // pred_region
      %52 = dma.done [#allocation3], 256
    $region21: #{tpu_custom_call.1} parent=1 // pred_fallthru
      _
    // Predicated region
    $region22: #{tpu_custom_call.1} parent=1 // pred_check
      _
    $region23: #{tpu_custom_call.1} parent=1 // pred_check_branch
      %54 = sbr.rel (0) target = $region25
    $region24: #{tpu_custom_call.1} parent=1 // pred_region
      %55 = dma.done [#allocation6], 64
    $region25: #{tpu_custom_call.1} parent=1 // pred_fallthru
      _
    // Predicated region
    $region26: #{tpu_custom_call.1} parent=1 // pred_check
      _
    $region27: #{tpu_custom_call.1} parent=1 // pred_check_branch
      %57 = sbr.rel (0) target = $region29
    $region28: #{tpu_custom_call.1} parent=1 // pred_region
      %58 = dma.done [#allocation6], 512
    $region29: #{tpu_custom_call.1} parent=1 // pred_fallthru
      _
    %v60 = vld [vmem:[#allocation2] sm:$0xff]
    %v61 = vld [vmem:[#allocation2 + $0x8] sm:$0xff]
    %v62 = vld [vmem:[#allocation5] sm:$0x1]
    %v63 = vld [vmem:[#allocation5 + $0x1] sm:$0x1]
    %s64 = scalar_lea.vmem [#allocation5], 2
    %v65 = vld [vmem:[%s64] sm:$0x1]
    %v66 = vld [vmem:[%s64 + $0x1] sm:$0x1]
    %v69 = vlaneseq
    %v70 = vshrl.u32 %v69, 7
    %v71 = vsub.s32 0, %v70
    %v72 = vrot.slane %v62, %v71
    %v73 = vlaneseq
    %v74 = vshrl.u32 %v73, 7
    %v75 = vsub.s32 0, %v74
    %v76 = vrot.slane %v63, %v75
    %v81 = vlaneseq
    %v82 = vshrl.u32 %v81, 7
    %v83 = vsub.s32 0, %v82
    %v84 = vrot.slane %v65, %v83
    %v85 = vlaneseq
    %v86 = vshrl.u32 %v85, 7
    %v87 = vsub.s32 0, %v86
    %v88 = vrot.slane %v66, %v87
    %v91 = vld [vmem:[%s3] sm:$0xff]
    %v92 = vpack.c.bf16 %v61, %v60
    %v93 = vld [vmem:[#allocation7] sm:$0xf]
    %v94 = vld [vmem:[#allocation7 + $0x8] sm:$0xf]
    %v95 = vld [vmem:[#allocation7 + $0x10] sm:$0xf]
    %v96 = vld [vmem:[#allocation7 + $0x18] sm:$0xf]
    %v97 = vlaneseq
    %v98 = vshrl.u32 %v97, 7
    %v99 = vsub.s32 0, %v98
    %v100 = vrot.slane %v91, %v99
    %v105 = vunpack.c.l.b16 %v93
    %v106 = vunpack.c.l.b16 %v94
    %v107 = vunpack.c.l.b16 %v95
    %v108 = vunpack.c.l.b16 %v96
    %v109 = vpack.c.b16 %v106, %v105
    %v110 = vpack.c.b16 %v108, %v107
    %vm113 = vcmask 261120
    %v115 = vsel %vm113, %v92, 0
    %117 = vmatprep.subr.bf16.mxu0 0
    %118 = vmatpush1.bf16.msra.mxu0 %v109
    %119 = vmatprep.subr.bf16.mxu0 0
    %120 = vmatpush1.bf16.msra.mxu0 %v110
    %121 = vmatprep.subr.bf16.mxu0 0
    %122 = vmatpush1.bf16.msra.mxu0 0
    %123 = vmatprep.subr.bf16.mxu0 0
    %124 = vmatpush1.bf16.msra.mxu0 0
    %125 = vmatprep.subr.bf16.mxu0 0
    %126 = vmatpush1.bf16.msra.mxu0 0
    %127 = vmatprep.subr.bf16.mxu0 0
    %128 = vmatpush1.bf16.msra.mxu0 0
    %129 = vmatprep.subr.bf16.mxu0 0
    %130 = vmatpush1.bf16.msra.mxu0 0
    %131 = vmatprep.subr.bf16.mxu0 0
    %132 = vmatpush1.bf16.msra.mxu0 0
    %133 = vmatprep.subr.bf16.mxu0 0
    %134 = vmatpush1.bf16.msra.mxu0 0
    %135 = vmatprep.subr.bf16.mxu0 0
    %136 = vmatpush1.bf16.msra.mxu0 0
    %137 = vmatprep.subr.bf16.mxu0 0
    %138 = vmatpush1.bf16.msra.mxu0 0
    %139 = vmatprep.subr.bf16.mxu0 0
    %140 = vmatpush1.bf16.msra.mxu0 0
    %141 = vmatprep.subr.bf16.mxu0 0
    %142 = vmatpush1.bf16.msra.mxu0 0
    %143 = vmatprep.subr.bf16.mxu0 0
    %144 = vmatpush1.bf16.msra.mxu0 0
    %145 = vmatprep.subr.bf16.mxu0 0
    %146 = vmatpush1.bf16.msra.mxu0 0
    %147 = vmatprep.subr.bf16.mxu0 0
    %148 = vmatpush1.bf16.msra.mxu0 0
    %149 = vmatprep.mubr.bf16.mxu0 0
    %150 = vmatmul.mubr.bf16.gmra.mrb[0].mxu0 %v115
    %v151 = vpop.f32.mrb[0].mxu0
    %v152 = vadd.f32 %v100, %v151
    %v153 = vpop.f32.mrb[0].mxu0
    %v154 = vpop.f32.mrb[0].mxu0
    %v155 = vadd.f32 %v100, %v154
    %v156 = vpop.f32.mrb[0].mxu0
    %157 = vdwg.mxu0
    %v158 = vpack.c.bf16 %v155, %v152
    %v160 = vunpack.c.l.b16 %v158
    %v161 = vunpack.c.h.b16 %v158
    %v162 = vpack.c.b16 %v160, %v160
    %v163 = vpack.c.b16 %v161, %v161
    %164 = vrot.lane.b32.xlu0 %v162, 96
    %v165 = vpop.permute.xlu0 %164
    %vm166 = vcmask 64512
    %v168 = vsel %vm166, %v162, 0
    %v171 = vsel %vm166, %v165, 0
    %173 = vmatprep.subr.bf16.mxu0 0
    %174 = vmatpush1.bf16.xpose.msra.mxu0 %v171
    %175 = vmatprep.subr.bf16.mxu0 0
    %176 = vmatpush1.bf16.xpose.msra.mxu0 0
    %177 = vmatprep.subr.bf16.mxu0 0
    %178 = vmatpush1.bf16.xpose.msra.mxu0 0
    %179 = vmatprep.subr.bf16.mxu0 0
    %180 = vmatpush1.bf16.xpose.msra.mxu0 0
    %181 = vmatprep.subr.bf16.mxu0 0
    %182 = vmatpush1.bf16.xpose.msra.mxu0 0
    %183 = vmatprep.subr.bf16.mxu0 0
    %184 = vmatpush1.bf16.xpose.msra.mxu0 0
    %185 = vmatprep.subr.bf16.mxu0 0
    %186 = vmatpush1.bf16.xpose.msra.mxu0 0
    %187 = vmatprep.subr.bf16.mxu0 0
    %188 = vmatpush1.bf16.xpose.msra.mxu0 0
    %189 = vmatprep.subr.bf16.mxu0 0
    %190 = vmatpush1.bf16.xpose.msra.mxu0 0
    %191 = vmatprep.subr.bf16.mxu0 0
    %192 = vmatpush1.bf16.xpose.msra.mxu0 0
    %193 = vmatprep.subr.bf16.mxu0 0
    %194 = vmatpush1.bf16.xpose.msra.mxu0 0
    %195 = vmatprep.subr.bf16.mxu0 0
    %196 = vmatpush1.bf16.xpose.msra.mxu0 0
    %197 = vmatprep.subr.bf16.mxu0 0
    %198 = vmatpush1.bf16.xpose.msra.mxu0 0
    %199 = vmatprep.subr.bf16.mxu0 0
    %200 = vmatpush1.bf16.xpose.msra.mxu0 0
    %201 = vmatprep.subr.bf16.mxu0 0
    %202 = vmatpush1.bf16.xpose.msra.mxu0 0
    %203 = vmatprep.subr.bf16.mxu0 0
    %204 = vmatpush1.bf16.xpose.msra.mxu0 0
    %205 = vmatprep.mubr.bf16.mxu0 0
    %206 = vmatmul.mubr.bf16.gmra.mrb[0].mxu0 %v168
    %v207 = vpop.f32.mrb[0].mxu0
    %v208 = vadd.f32 0.0, %v207
    %v209 = vpop.f32.mrb[0].mxu0
    %v210 = vpop.f32.mrb[0].mxu0
    %v211 = vpop.f32.mrb[0].mxu0
    %212 = vdwg.mxu0
    %213 = vrot.lane.b32.xlu0 %v163, 96
    %v214 = vpop.permute.xlu0 %213
    %v216 = vsel %vm166, %v163, 0
    %v219 = vsel %vm166, %v214, 0
    %221 = vmatprep.subr.bf16.mxu0 0
    %222 = vmatpush1.bf16.xpose.msra.mxu0 %v219
    %223 = vmatprep.subr.bf16.mxu0 0
    %224 = vmatpush1.bf16.xpose.msra.mxu0 0
    %225 = vmatprep.subr.bf16.mxu0 0
    %226 = vmatpush1.bf16.xpose.msra.mxu0 0
    %227 = vmatprep.subr.bf16.mxu0 0
    %228 = vmatpush1.bf16.xpose.msra.mxu0 0
    %229 = vmatprep.subr.bf16.mxu0 0
    %230 = vmatpush1.bf16.xpose.msra.mxu0 0
    %231 = vmatprep.subr.bf16.mxu0 0
    %232 = vmatpush1.bf16.xpose.msra.mxu0 0
    %233 = vmatprep.subr.bf16.mxu0 0
    %234 = vmatpush1.bf16.xpose.msra.mxu0 0
    %235 = vmatprep.subr.bf16.mxu0 0
    %236 = vmatpush1.bf16.xpose.msra.mxu0 0
    %237 = vmatprep.subr.bf16.mxu0 0
    %238 = vmatpush1.bf16.xpose.msra.mxu0 0
    %239 = vmatprep.subr.bf16.mxu0 0
    %240 = vmatpush1.bf16.xpose.msra.mxu0 0
    %241 = vmatprep.subr.bf16.mxu0 0
    %242 = vmatpush1.bf16.xpose.msra.mxu0 0
    %243 = vmatprep.subr.bf16.mxu0 0
    %244 = vmatpush1.bf16.xpose.msra.mxu0 0
    %245 = vmatprep.subr.bf16.mxu0 0
    %246 = vmatpush1.bf16.xpose.msra.mxu0 0
    %247 = vmatprep.subr.bf16.mxu0 0
    %248 = vmatpush1.bf16.xpose.msra.mxu0 0
    %249 = vmatprep.subr.bf16.mxu0 0
    %250 = vmatpush1.bf16.xpose.msra.mxu0 0
    %251 = vmatprep.subr.bf16.mxu0 0
    %252 = vmatpush1.bf16.xpose.msra.mxu0 0
    %253 = vmatprep.mubr.bf16.mxu0 0
    %254 = vmatmul.mubr.bf16.gmra.mrb[0].mxu0 %v216
    %v255 = vpop.f32.mrb[0].mxu0
    %v256 = vadd.f32 0.0, %v255
    %v257 = vpop.f32.mrb[0].mxu0
    %v258 = vpop.f32.mrb[0].mxu0
    %v259 = vpop.f32.mrb[0].mxu0
    %260 = vdwg.mxu0
    %v261 = vmul.f32 %v208, 0.35355338
    %v262 = vmul.f32 %v256, 0.35355338
    %v263 = vadd.f32 %v261, %v72
    %v264 = vadd.f32 %v262, %v76
    %v265 = vsel %vm166, %v263, -inf
    %266 = vmax.xlane.f32.xlu0 %v265
    %v267 = vpop.xlane.xlu0 %266
    %v268 = vsel %vm166, %v264, -inf
    %269 = vmax.xlane.f32.xlu0 %v268
    %v270 = vpop.xlane.xlu0 %269
    %v271 = vsub.f32 %v263, %v267
    %v272 = vsub.f32 %v264, %v270
    %v273 = vmul.f32 %v271, 1.442695
    %v274 = vpow.pop %v273
    %v275 = vmul.f32 %v272, 1.442695
    %v276 = vpow.pop %v275
    %v277 = vsel %vm166, %v274, 0.0
    %278 = vadd.xlane.f32.xlu0 %v277
    %v279 = vpop.xlane.xlu0 %278
    %v280 = vsel %vm166, %v276, 0.0
    %281 = vadd.xlane.f32.xlu0 %v280
    %v282 = vpop.xlane.xlu0 %281
    %v283 = vrcp.pop %v279
    %v284 = vrcp.pop %v282
    %v285 = vmul.f32 %v274, %v283
    %v286 = vmul.f32 %v276, %v284
    %v287 = vmul.f32 %v285, %v84
    %v288 = vmul.f32 %v286, %v88
    %v289 = vpack.c.bf16 %v287, %v287
    %v290 = vpack.c.bf16 %v288, %v288
    %291 = vrot.lane.b32.xlu0 %v162, 64
    %v292 = vpop.permute.xlu0 %291
    %v294 = vsel %vm166, %v289, 0
    %vm296 = vcmask 1043456
    %v298 = vsel %vm296, %v292, 0
    %300 = vmatprep.subr.bf16.mxu0 0
    %301 = vmatpush1.bf16.msra.mxu0 %v298
    %302 = vmatprep.subr.bf16.mxu0 0
    %303 = vmatpush1.bf16.msra.mxu0 0
    %304 = vmatprep.subr.bf16.mxu0 0
    %305 = vmatpush1.bf16.msra.mxu0 0
    %306 = vmatprep.subr.bf16.mxu0 0
    %307 = vmatpush1.bf16.msra.mxu0 0
    %308 = vmatprep.subr.bf16.mxu0 0
    %309 = vmatpush1.bf16.msra.mxu0 0
    %310 = vmatprep.subr.bf16.mxu0 0
    %311 = vmatpush1.bf16.msra.mxu0 0
    %312 = vmatprep.subr.bf16.mxu0 0
    %313 = vmatpush1.bf16.msra.mxu0 0
    %314 = vmatprep.subr.bf16.mxu0 0
    %315 = vmatpush1.bf16.msra.mxu0 0
    %316 = vmatprep.subr.bf16.mxu0 0
    %317 = vmatpush1.bf16.msra.mxu0 0
    %318 = vmatprep.subr.bf16.mxu0 0
    %319 = vmatpush1.bf16.msra.mxu0 0
    %320 = vmatprep.subr.bf16.mxu0 0
    %321 = vmatpush1.bf16.msra.mxu0 0
    %322 = vmatprep.subr.bf16.mxu0 0
    %323 = vmatpush1.bf16.msra.mxu0 0
    %324 = vmatprep.subr.bf16.mxu0 0
    %325 = vmatpush1.bf16.msra.mxu0 0
    %326 = vmatprep.subr.bf16.mxu0 0
    %327 = vmatpush1.bf16.msra.mxu0 0
    %328 = vmatprep.subr.bf16.mxu0 0
    %329 = vmatpush1.bf16.msra.mxu0 0
    %330 = vmatprep.subr.bf16.mxu0 0
    %331 = vmatpush1.bf16.msra.mxu0 0
    %332 = vmatprep.mubr.bf16.mxu0 0
    %333 = vmatmul.mubr.bf16.gmra.mrb[0].mxu0 %v294
    %v334 = vpop.f32.mrb[0].mxu0
    %v335 = vadd.f32 0.0, %v334
    %v336 = vpop.f32.mrb[0].mxu0
    %v337 = vpop.f32.mrb[0].mxu0
    %v338 = vpop.f32.mrb[0].mxu0
    %339 = vdwg.mxu0
    %340 = vrot.lane.b32.xlu0 %v163, 64
    %v341 = vpop.permute.xlu0 %340
    %v343 = vsel %vm166, %v290, 0
    %v346 = vsel %vm296, %v341, 0
    %348 = vmatprep.subr.bf16.mxu0 0
    %349 = vmatpush1.bf16.msra.mxu0 %v346
    %350 = vmatprep.subr.bf16.mxu0 0
    %351 = vmatpush1.bf16.msra.mxu0 0
    %352 = vmatprep.subr.bf16.mxu0 0
    %353 = vmatpush1.bf16.msra.mxu0 0
    %354 = vmatprep.subr.bf16.mxu0 0
    %355 = vmatpush1.bf16.msra.mxu0 0
    %356 = vmatprep.subr.bf16.mxu0 0
    %357 = vmatpush1.bf16.msra.mxu0 0
    %358 = vmatprep.subr.bf16.mxu0 0
    %359 = vmatpush1.bf16.msra.mxu0 0
    %360 = vmatprep.subr.bf16.mxu0 0
    %361 = vmatpush1.bf16.msra.mxu0 0
    %362 = vmatprep.subr.bf16.mxu0 0
    %363 = vmatpush1.bf16.msra.mxu0 0
    %364 = vmatprep.subr.bf16.mxu0 0
    %365 = vmatpush1.bf16.msra.mxu0 0
    %366 = vmatprep.subr.bf16.mxu0 0
    %367 = vmatpush1.bf16.msra.mxu0 0
    %368 = vmatprep.subr.bf16.mxu0 0
    %369 = vmatpush1.bf16.msra.mxu0 0
    %370 = vmatprep.subr.bf16.mxu0 0
    %371 = vmatpush1.bf16.msra.mxu0 0
    %372 = vmatprep.subr.bf16.mxu0 0
    %373 = vmatpush1.bf16.msra.mxu0 0
    %374 = vmatprep.subr.bf16.mxu0 0
    %375 = vmatpush1.bf16.msra.mxu0 0
    %376 = vmatprep.subr.bf16.mxu0 0
    %377 = vmatpush1.bf16.msra.mxu0 0
    %378 = vmatprep.subr.bf16.mxu0 0
    %379 = vmatpush1.bf16.msra.mxu0 0
    %380 = vmatprep.mubr.bf16.mxu0 0
    %381 = vmatmul.mubr.bf16.gmra.mrb[0].mxu0 %v343
    %v382 = vpop.f32.mrb[0].mxu0
    %v383 = vadd.f32 0.0, %v382
    %v384 = vpop.f32.mrb[0].mxu0
    %v385 = vpop.f32.mrb[0].mxu0
    %v386 = vpop.f32.mrb[0].mxu0
    %387 = vdwg.mxu0
    %v388 = vpack.c.bf16 %v383, %v335
    %v389 = vld [vmem:[#allocation7] sm:$0xf]
    %390 = vrot.lane.b32.xlu0 %v162, 120
    %v391 = vpop.permute.xlu0 %390
    %392 = vrot.lane.b32.xlu0 %v162, 88
    %v393 = vpop.permute.xlu0 %392
    %v395 = vsel %vm166, %v391, 0
    %v398 = vsel %vm166, %v393, 0
    %400 = vmatprep.subr.bf16.mxu0 0
    %401 = vmatpush1.bf16.xpose.msra.mxu0 %v398
    %402 = vmatprep.subr.bf16.mxu0 0
    %403 = vmatpush1.bf16.xpose.msra.mxu0 0
    %404 = vmatprep.subr.bf16.mxu0 0
    %405 = vmatpush1.bf16.xpose.msra.mxu0 0
    %406 = vmatprep.subr.bf16.mxu0 0
    %407 = vmatpush1.bf16.xpose.msra.mxu0 0
    %408 = vmatprep.subr.bf16.mxu0 0
    %409 = vmatpush1.bf16.xpose.msra.mxu0 0
    %410 = vmatprep.subr.bf16.mxu0 0
    %411 = vmatpush1.bf16.xpose.msra.mxu0 0
    %412 = vmatprep.subr.bf16.mxu0 0
    %413 = vmatpush1.bf16.xpose.msra.mxu0 0
    %414 = vmatprep.subr.bf16.mxu0 0
    %415 = vmatpush1.bf16.xpose.msra.mxu0 0
    %416 = vmatprep.subr.bf16.mxu0 0
    %417 = vmatpush1.bf16.xpose.msra.mxu0 0
    %418 = vmatprep.subr.bf16.mxu0 0
    %419 = vmatpush1.bf16.xpose.msra.mxu0 0
    %420 = vmatprep.subr.bf16.mxu0 0
    %421 = vmatpush1.bf16.xpose.msra.mxu0 0
    %422 = vmatprep.subr.bf16.mxu0 0
    %423 = vmatpush1.bf16.xpose.msra.mxu0 0
    %424 = vmatprep.subr.bf16.mxu0 0
    %425 = vmatpush1.bf16.xpose.msra.mxu0 0
    %426 = vmatprep.subr.bf16.mxu0 0
    %427 = vmatpush1.bf16.xpose.msra.mxu0 0
    %428 = vmatprep.subr.bf16.mxu0 0
    %429 = vmatpush1.bf16.xpose.msra.mxu0 0
    %430 = vmatprep.subr.bf16.mxu0 0
    %431 = vmatpush1.bf16.xpose.msra.mxu0 0
    %432 = vmatprep.mubr.bf16.mxu0 0
    %433 = vmatmul.mubr.bf16.gmra.mrb[0].mxu0 %v395
    %v434 = vpop.f32.mrb[0].mxu0
    %v435 = vadd.f32 0.0, %v434
    %v436 = vpop.f32.mrb[0].mxu0
    %v437 = vpop.f32.mrb[0].mxu0
    %v438 = vpop.f32.mrb[0].mxu0
    %439 = vdwg.mxu0
    %440 = vrot.lane.b32.xlu0 %v163, 120
    %v441 = vpop.permute.xlu0 %440
    %442 = vrot.lane.b32.xlu0 %v163, 88
    %v443 = vpop.permute.xlu0 %442
    %v445 = vsel %vm166, %v441, 0
    %v448 = vsel %vm166, %v443, 0
    %450 = vmatprep.subr.bf16.mxu0 0
    %451 = vmatpush1.bf16.xpose.msra.mxu0 %v448
    %452 = vmatprep.subr.bf16.mxu0 0
    %453 = vmatpush1.bf16.xpose.msra.mxu0 0
    %454 = vmatprep.subr.bf16.mxu0 0
    %455 = vmatpush1.bf16.xpose.msra.mxu0 0
    %456 = vmatprep.subr.bf16.mxu0 0
    %457 = vmatpush1.bf16.xpose.msra.mxu0 0
    %458 = vmatprep.subr.bf16.mxu0 0
    %459 = vmatpush1.bf16.xpose.msra.mxu0 0
    %460 = vmatprep.subr.bf16.mxu0 0
    %461 = vmatpush1.bf16.xpose.msra.mxu0 0
    %462 = vmatprep.subr.bf16.mxu0 0
    %463 = vmatpush1.bf16.xpose.msra.mxu0 0
    %464 = vmatprep.subr.bf16.mxu0 0
    %465 = vmatpush1.bf16.xpose.msra.mxu0 0
    %466 = vmatprep.subr.bf16.mxu0 0
    %467 = vmatpush1.bf16.xpose.msra.mxu0 0
    %468 = vmatprep.subr.bf16.mxu0 0
    %469 = vmatpush1.bf16.xpose.msra.mxu0 0
    %470 = vmatprep.subr.bf16.mxu0 0
    %471 = vmatpush1.bf16.xpose.msra.mxu0 0
    %472 = vmatprep.subr.bf16.mxu0 0
    %473 = vmatpush1.bf16.xpose.msra.mxu0 0
    %474 = vmatprep.subr.bf16.mxu0 0
    %475 = vmatpush1.bf16.xpose.msra.mxu0 0
    %476 = vmatprep.subr.bf16.mxu0 0
    %477 = vmatpush1.bf16.xpose.msra.mxu0 0
    %478 = vmatprep.subr.bf16.mxu0 0
    %479 = vmatpush1.bf16.xpose.msra.mxu0 0
    %480 = vmatprep.subr.bf16.mxu0 0
    %481 = vmatpush1.bf16.xpose.msra.mxu0 0
    %482 = vmatprep.mubr.bf16.mxu0 0
    %483 = vmatmul.mubr.bf16.gmra.mrb[0].mxu0 %v445
    %v484 = vpop.f32.mrb[0].mxu0
    %v485 = vadd.f32 0.0, %v484
    %v486 = vpop.f32.mrb[0].mxu0
    %v487 = vpop.f32.mrb[0].mxu0
    %v488 = vpop.f32.mrb[0].mxu0
    %489 = vdwg.mxu0
    %v490 = vmul.f32 %v435, 0.35355338
    %v491 = vmul.f32 %v485, 0.35355338
    %v492 = vadd.f32 %v490, %v72
    %v493 = vadd.f32 %v491, %v76
    %v494 = vsel %vm166, %v492, -inf
    %495 = vmax.xlane.f32.xlu0 %v494
    %v496 = vpop.xlane.xlu0 %495
    %v497 = vsel %vm166, %v493, -inf
    %498 = vmax.xlane.f32.xlu0 %v497
    %v499 = vpop.xlane.xlu0 %498
    %v500 = vsub.f32 %v492, %v496
    %v501 = vsub.f32 %v493, %v499
    %v502 = vmul.f32 %v500, 1.442695
    %v503 = vpow.pop %v502
    %v504 = vmul.f32 %v501, 1.442695
    %v505 = vpow.pop %v504
    %v506 = vsel %vm166, %v503, 0.0
    %507 = vadd.xlane.f32.xlu0 %v506
    %v508 = vpop.xlane.xlu0 %507
    %v509 = vsel %vm166, %v505, 0.0
    %510 = vadd.xlane.f32.xlu0 %v509
    %v511 = vpop.xlane.xlu0 %510
    %v512 = vrcp.pop %v508
    %v513 = vrcp.pop %v511
    %v514 = vmul.f32 %v503, %v512
    %v515 = vmul.f32 %v505, %v513
    %v516 = vmul.f32 %v514, %v84
    %v517 = vmul.f32 %v515, %v88
    %v518 = vpack.c.bf16 %v516, %v516
    %v519 = vpack.c.bf16 %v517, %v517
    %520 = vrot.lane.b32.xlu0 %v162, 56
    %v521 = vpop.permute.xlu0 %520
    %v523 = vsel %vm166, %v518, 0
    %v526 = vsel %vm296, %v521, 0
    %528 = vmatprep.subr.bf16.mxu0 0
    %529 = vmatpush1.bf16.msra.mxu0 %v526
    %530 = vmatprep.subr.bf16.mxu0 0
    %531 = vmatpush1.bf16.msra.mxu0 0
    %532 = vmatprep.subr.bf16.mxu0 0
    %533 = vmatpush1.bf16.msra.mxu0 0
    %534 = vmatprep.subr.bf16.mxu0 0
    %535 = vmatpush1.bf16.msra.mxu0 0
    %536 = vmatprep.subr.bf16.mxu0 0
    %537 = vmatpush1.bf16.msra.mxu0 0
    %538 = vmatprep.subr.bf16.mxu0 0
    %539 = vmatpush1.bf16.msra.mxu0 0
    %540 = vmatprep.subr.bf16.mxu0 0
    %541 = vmatpush1.bf16.msra.mxu0 0
    %542 = vmatprep.subr.bf16.mxu0 0
    %543 = vmatpush1.bf16.msra.mxu0 0
    %544 = vmatprep.subr.bf16.mxu0 0
    %545 = vmatpush1.bf16.msra.mxu0 0
    %546 = vmatprep.subr.bf16.mxu0 0
    %547 = vmatpush1.bf16.msra.mxu0 0
    %548 = vmatprep.subr.bf16.mxu0 0
    %549 = vmatpush1.bf16.msra.mxu0 0
    %550 = vmatprep.subr.bf16.mxu0 0
    %551 = vmatpush1.bf16.msra.mxu0 0
    %552 = vmatprep.subr.bf16.mxu0 0
    %553 = vmatpush1.bf16.msra.mxu0 0
    %554 = vmatprep.subr.bf16.mxu0 0
    %555 = vmatpush1.bf16.msra.mxu0 0
    %556 = vmatprep.subr.bf16.mxu0 0
    %557 = vmatpush1.bf16.msra.mxu0 0
    %558 = vmatprep.subr.bf16.mxu0 0
    %559 = vmatpush1.bf16.msra.mxu0 0
    %560 = vmatprep.mubr.bf16.mxu0 0
    %561 = vmatmul.mubr.bf16.gmra.mrb[0].mxu0 %v523
    %v562 = vpop.f32.mrb[0].mxu0
    %v563 = vadd.f32 0.0, %v562
    %v564 = vpop.f32.mrb[0].mxu0
    %v565 = vpop.f32.mrb[0].mxu0
    %v566 = vpop.f32.mrb[0].mxu0
    %567 = vdwg.mxu0
    %568 = vrot.lane.b32.xlu0 %v163, 56
    %v569 = vpop.permute.xlu0 %568
    %v571 = vsel %vm166, %v519, 0
    %v574 = vsel %vm296, %v569, 0
    %576 = vmatprep.subr.bf16.mxu0 0
    %577 = vmatpush1.bf16.msra.mxu0 %v574
    %578 = vmatprep.subr.bf16.mxu0 0
    %579 = vmatpush1.bf16.msra.mxu0 0
    %580 = vmatprep.subr.bf16.mxu0 0
    %581 = vmatpush1.bf16.msra.mxu0 0
    %582 = vmatprep.subr.bf16.mxu0 0
    %583 = vmatpush1.bf16.msra.mxu0 0
    %584 = vmatprep.subr.bf16.mxu0 0
    %585 = vmatpush1.bf16.msra.mxu0 0
    %586 = vmatprep.subr.bf16.mxu0 0
    %587 = vmatpush1.bf16.msra.mxu0 0
    %588 = vmatprep.subr.bf16.mxu0 0
    %589 = vmatpush1.bf16.msra.mxu0 0
    %590 = vmatprep.subr.bf16.mxu0 0
    %591 = vmatpush1.bf16.msra.mxu0 0
    %592 = vmatprep.subr.bf16.mxu0 0
    %593 = vmatpush1.bf16.msra.mxu0 0
    %594 = vmatprep.subr.bf16.mxu0 0
    %595 = vmatpush1.bf16.msra.mxu0 0
    %596 = vmatprep.subr.bf16.mxu0 0
    %597 = vmatpush1.bf16.msra.mxu0 0
    %598 = vmatprep.subr.bf16.mxu0 0
    %599 = vmatpush1.bf16.msra.mxu0 0
    %600 = vmatprep.subr.bf16.mxu0 0
    %601 = vmatpush1.bf16.msra.mxu0 0
    %602 = vmatprep.subr.bf16.mxu0 0
    %603 = vmatpush1.bf16.msra.mxu0 0
    %604 = vmatprep.subr.bf16.mxu0 0
    %605 = vmatpush1.bf16.msra.mxu0 0
    %606 = vmatprep.subr.bf16.mxu0 0
    %607 = vmatpush1.bf16.msra.mxu0 0
    %608 = vmatprep.mubr.bf16.mxu0 0
    %609 = vmatmul.mubr.bf16.gmra.mrb[0].mxu0 %v571
    %v610 = vpop.f32.mrb[0].mxu0
    %v611 = vadd.f32 0.0, %v610
    %v612 = vpop.f32.mrb[0].mxu0
    %v613 = vpop.f32.mrb[0].mxu0
    %v614 = vpop.f32.mrb[0].mxu0
    %615 = vdwg.mxu0
    %v616 = vpack.c.bf16 %v611, %v563
    %v617 = vld [vmem:[#allocation7 + $0x8] sm:$0xf]
    %v619 = vunpack.c.l.b16 %v617
    %v620 = vpack.c.b16 %v619, %v619
    %621 = vrot.lane.b32.xlu0 %v620, 32
    %v622 = vpop.permute.xlu0 %621
    %v624 = vsel %vm166, %v616, 0
    %v627 = vsel %vm296, %v622, 0
    %629 = vmatprep.subr.bf16.mxu0 0
    %630 = vmatpush1.bf16.msra.mxu0 %v627
    %631 = vmatprep.subr.bf16.mxu0 0
    %632 = vmatpush1.bf16.msra.mxu0 0
    %633 = vmatprep.subr.bf16.mxu0 0
    %634 = vmatpush1.bf16.msra.mxu0 0
    %635 = vmatprep.subr.bf16.mxu0 0
    %636 = vmatpush1.bf16.msra.mxu0 0
    %637 = vmatprep.subr.bf16.mxu0 0
    %638 = vmatpush1.bf16.msra.mxu0 0
    %639 = vmatprep.subr.bf16.mxu0 0
    %640 = vmatpush1.bf16.msra.mxu0 0
    %641 = vmatprep.subr.bf16.mxu0 0
    %642 = vmatpush1.bf16.msra.mxu0 0
    %643 = vmatprep.subr.bf16.mxu0 0
    %644 = vmatpush1.bf16.msra.mxu0 0
    %645 = vmatprep.subr.bf16.mxu0 0
    %646 = vmatpush1.bf16.msra.mxu0 0
    %647 = vmatprep.subr.bf16.mxu0 0
    %648 = vmatpush1.bf16.msra.mxu0 0
    %649 = vmatprep.subr.bf16.mxu0 0
    %650 = vmatpush1.bf16.msra.mxu0 0
    %651 = vmatprep.subr.bf16.mxu0 0
    %652 = vmatpush1.bf16.msra.mxu0 0
    %653 = vmatprep.subr.bf16.mxu0 0
    %654 = vmatpush1.bf16.msra.mxu0 0
    %655 = vmatprep.subr.bf16.mxu0 0
    %656 = vmatpush1.bf16.msra.mxu0 0
    %657 = vmatprep.subr.bf16.mxu0 0
    %658 = vmatpush1.bf16.msra.mxu0 0
    %659 = vmatprep.subr.bf16.mxu0 0
    %660 = vmatpush1.bf16.msra.mxu0 0
    %661 = vmatprep.mubr.bf16.mxu0 0
    %662 = vmatmul.mubr.bf16.gmra.mrb[0].mxu0 %v624
    %v663 = vpop.f32.mrb[0].mxu0
    %v664 = vadd.f32 0.0, %v663
    %v665 = vpop.f32.mrb[0].mxu0
    %v666 = vpop.f32.mrb[0].mxu0
    %v667 = vadd.f32 0.0, %v666
    %v668 = vpop.f32.mrb[0].mxu0
    %669 = vdwg.mxu0
    %v671 = vunpack.c.l.b16 %v389
    %v672 = vpack.c.b16 %v671, %v671
    %673 = vrot.lane.b32.xlu0 %v672, 32
    %v674 = vpop.permute.xlu0 %673
    %v676 = vsel %vm166, %v388, 0
    %v679 = vsel %vm296, %v674, 0
    %681 = vmatprep.subr.bf16.mxu0 0
    %682 = vmatpush1.bf16.msra.mxu0 %v679
    %683 = vmatprep.subr.bf16.mxu0 0
    %684 = vmatpush1.bf16.msra.mxu0 0
    %685 = vmatprep.subr.bf16.mxu0 0
    %686 = vmatpush1.bf16.msra.mxu0 0
    %687 = vmatprep.subr.bf16.mxu0 0
    %688 = vmatpush1.bf16.msra.mxu0 0
    %689 = vmatprep.subr.bf16.mxu0 0
    %690 = vmatpush1.bf16.msra.mxu0 0
    %691 = vmatprep.subr.bf16.mxu0 0
    %692 = vmatpush1.bf16.msra.mxu0 0
    %693 = vmatprep.subr.bf16.mxu0 0
    %694 = vmatpush1.bf16.msra.mxu0 0
    %695 = vmatprep.subr.bf16.mxu0 0
    %696 = vmatpush1.bf16.msra.mxu0 0
    %697 = vmatprep.subr.bf16.mxu0 0
    %698 = vmatpush1.bf16.msra.mxu0 0
    %699 = vmatprep.subr.bf16.mxu0 0
    %700 = vmatpush1.bf16.msra.mxu0 0
    %701 = vmatprep.subr.bf16.mxu0 0
    %702 = vmatpush1.bf16.msra.mxu0 0
    %703 = vmatprep.subr.bf16.mxu0 0
    %704 = vmatpush1.bf16.msra.mxu0 0
    %705 = vmatprep.subr.bf16.mxu0 0
    %706 = vmatpush1.bf16.msra.mxu0 0
    %707 = vmatprep.subr.bf16.mxu0 0
    %708 = vmatpush1.bf16.msra.mxu0 0
    %709 = vmatprep.subr.bf16.mxu0 0
    %710 = vmatpush1.bf16.msra.mxu0 0
    %711 = vmatprep.subr.bf16.mxu0 0
    %712 = vmatpush1.bf16.msra.mxu0 0
    %713 = vmatprep.mubr.bf16.mxu0 0
    %714 = vmatmul.mubr.bf16.gmra.mrb[0].mxu0 %v676
    %v715 = vpop.f32.mrb[0].mxu0
    %v716 = vadd.f32 %v664, %v715
    %v717 = vpop.f32.mrb[0].mxu0
    %v718 = vpop.f32.mrb[0].mxu0
    %v719 = vadd.f32 %v667, %v718
    %v720 = vpop.f32.mrb[0].mxu0
    %721 = vdwg.mxu0
    %722 = vrot.lane.b32.xlu0 %v162, 112
    %v723 = vpop.permute.xlu0 %722
    %724 = vrot.lane.b32.xlu0 %v162, 80
    %v725 = vpop.permute.xlu0 %724
    %v727 = vsel %vm166, %v723, 0
    %v730 = vsel %vm166, %v725, 0
    %732 = vmatprep.subr.bf16.mxu0 0
    %733 = vmatpush1.bf16.xpose.msra.mxu0 %v730
    %734 = vmatprep.subr.bf16.mxu0 0
    %735 = vmatpush1.bf16.xpose.msra.mxu0 0
    %736 = vmatprep.subr.bf16.mxu0 0
    %737 = vmatpush1.bf16.xpose.msra.mxu0 0
    %738 = vmatprep.subr.bf16.mxu0 0
    %739 = vmatpush1.bf16.xpose.msra.mxu0 0
    %740 = vmatprep.subr.bf16.mxu0 0
    %741 = vmatpush1.bf16.xpose.msra.mxu0 0
    %742 = vmatprep.subr.bf16.mxu0 0
    %743 = vmatpush1.bf16.xpose.msra.mxu0 0
    %744 = vmatprep.subr.bf16.mxu0 0
    %745 = vmatpush1.bf16.xpose.msra.mxu0 0
    %746 = vmatprep.subr.bf16.mxu0 0
    %747 = vmatpush1.bf16.xpose.msra.mxu0 0
    %748 = vmatprep.subr.bf16.mxu0 0
    %749 = vmatpush1.bf16.xpose.msra.mxu0 0
    %750 = vmatprep.subr.bf16.mxu0 0
    %751 = vmatpush1.bf16.xpose.msra.mxu0 0
    %752 = vmatprep.subr.bf16.mxu0 0
    %753 = vmatpush1.bf16.xpose.msra.mxu0 0
    %754 = vmatprep.subr.bf16.mxu0 0
    %755 = vmatpush1.bf16.xpose.msra.mxu0 0
    %756 = vmatprep.subr.bf16.mxu0 0
    %757 = vmatpush1.bf16.xpose.msra.mxu0 0
    %758 = vmatprep.subr.bf16.mxu0 0
    %759 = vmatpush1.bf16.xpose.msra.mxu0 0
    %760 = vmatprep.subr.bf16.mxu0 0
    %761 = vmatpush1.bf16.xpose.msra.mxu0 0
    %762 = vmatprep.subr.bf16.mxu0 0
    %763 = vmatpush1.bf16.xpose.msra.mxu0 0
    %764 = vmatprep.mubr.bf16.mxu0 0
    %765 = vmatmul.mubr.bf16.gmra.mrb[0].mxu0 %v727
    %v766 = vpop.f32.mrb[0].mxu0
    %v767 = vadd.f32 0.0, %v766
    %v768 = vpop.f32.mrb[0].mxu0
    %v769 = vpop.f32.mrb[0].mxu0
    %v770 = vpop.f32.mrb[0].mxu0
    %771 = vdwg.mxu0
    %772 = vrot.lane.b32.xlu0 %v163, 112
    %v773 = vpop.permute.xlu0 %772
    %774 = vrot.lane.b32.xlu0 %v163, 80
    %v775 = vpop.permute.xlu0 %774
    %v777 = vsel %vm166, %v773, 0
    %v780 = vsel %vm166, %v775, 0
    %782 = vmatprep.subr.bf16.mxu0 0
    %783 = vmatpush1.bf16.xpose.msra.mxu0 %v780
    %784 = vmatprep.subr.bf16.mxu0 0
    %785 = vmatpush1.bf16.xpose.msra.mxu0 0
    %786 = vmatprep.subr.bf16.mxu0 0
    %787 = vmatpush1.bf16.xpose.msra.mxu0 0
    %788 = vmatprep.subr.bf16.mxu0 0
    %789 = vmatpush1.bf16.xpose.msra.mxu0 0
    %790 = vmatprep.subr.bf16.mxu0 0
    %791 = vmatpush1.bf16.xpose.msra.mxu0 0
    %792 = vmatprep.subr.bf16.mxu0 0
    %793 = vmatpush1.bf16.xpose.msra.mxu0 0
    %794 = vmatprep.subr.bf16.mxu0 0
    %795 = vmatpush1.bf16.xpose.msra.mxu0 0
    %796 = vmatprep.subr.bf16.mxu0 0
    %797 = vmatpush1.bf16.xpose.msra.mxu0 0
    %798 = vmatprep.subr.bf16.mxu0 0
    %799 = vmatpush1.bf16.xpose.msra.mxu0 0
    %800 = vmatprep.subr.bf16.mxu0 0
    %801 = vmatpush1.bf16.xpose.msra.mxu0 0
    %802 = vmatprep.subr.bf16.mxu0 0
    %803 = vmatpush1.bf16.xpose.msra.mxu0 0
    %804 = vmatprep.subr.bf16.mxu0 0
    %805 = vmatpush1.bf16.xpose.msra.mxu0 0
    %806 = vmatprep.subr.bf16.mxu0 0
    %807 = vmatpush1.bf16.xpose.msra.mxu0 0
    %808 = vmatprep.subr.bf16.mxu0 0
    %809 = vmatpush1.bf16.xpose.msra.mxu0 0
    %810 = vmatprep.subr.bf16.mxu0 0
    %811 = vmatpush1.bf16.xpose.msra.mxu0 0
    %812 = vmatprep.subr.bf16.mxu0 0
    %813 = vmatpush1.bf16.xpose.msra.mxu0 0
    %814 = vmatprep.mubr.bf16.mxu0 0
    %815 = vmatmul.mubr.bf16.gmra.mrb[0].mxu0 %v777
    %v816 = vpop.f32.mrb[0].mxu0
    %v817 = vadd.f32 0.0, %v816
    %v818 = vpop.f32.mrb[0].mxu0
    %v819 = vpop.f32.mrb[0].mxu0
    %v820 = vpop.f32.mrb[0].mxu0
    %821 = vdwg.mxu0
    %v822 = vmul.f32 %v767, 0.35355338
    %v823 = vmul.f32 %v817, 0.35355338
    %v824 = vadd.f32 %v822, %v72
    %v825 = vadd.f32 %v823, %v76
    %v826 = vsel %vm166, %v824, -inf
    %827 = vmax.xlane.f32.xlu0 %v826
    %v828 = vpop.xlane.xlu0 %827
    %v829 = vsel %vm166, %v825, -inf
    %830 = vmax.xlane.f32.xlu0 %v829
    %v831 = vpop.xlane.xlu0 %830
    %v832 = vsub.f32 %v824, %v828
    %v833 = vsub.f32 %v825, %v831
    %v834 = vmul.f32 %v832, 1.442695
    %v835 = vpow.pop %v834
    %v836 = vmul.f32 %v833, 1.442695
    %v837 = vpow.pop %v836
    %v838 = vsel %vm166, %v835, 0.0
    %839 = vadd.xlane.f32.xlu0 %v838
    %v840 = vpop.xlane.xlu0 %839
    %v841 = vsel %vm166, %v837, 0.0
    %842 = vadd.xlane.f32.xlu0 %v841
    %v843 = vpop.xlane.xlu0 %842
    %v844 = vrcp.pop %v840
    %v845 = vrcp.pop %v843
    %v846 = vmul.f32 %v835, %v844
    %v847 = vmul.f32 %v837, %v845
    %v848 = vmul.f32 %v846, %v84
    %v849 = vmul.f32 %v847, %v88
    %v850 = vpack.c.bf16 %v848, %v848
    %v851 = vpack.c.bf16 %v849, %v849
    %852 = vrot.lane.b32.xlu0 %v162, 48
    %v853 = vpop.permute.xlu0 %852
    %v855 = vsel %vm166, %v850, 0
    %v858 = vsel %vm296, %v853, 0
    %860 = vmatprep.subr.bf16.mxu0 0
    %861 = vmatpush1.bf16.msra.mxu0 %v858
    %862 = vmatprep.subr.bf16.mxu0 0
    %863 = vmatpush1.bf16.msra.mxu0 0
    %864 = vmatprep.subr.bf16.mxu0 0
    %865 = vmatpush1.bf16.msra.mxu0 0
    %866 = vmatprep.subr.bf16.mxu0 0
    %867 = vmatpush1.bf16.msra.mxu0 0
    %868 = vmatprep.subr.bf16.mxu0 0
    %869 = vmatpush1.bf16.msra.mxu0 0
    %870 = vmatprep.subr.bf16.mxu0 0
    %871 = vmatpush1.bf16.msra.mxu0 0
    %872 = vmatprep.subr.bf16.mxu0 0
    %873 = vmatpush1.bf16.msra.mxu0 0
    %874 = vmatprep.subr.bf16.mxu0 0
    %875 = vmatpush1.bf16.msra.mxu0 0
    %876 = vmatprep.subr.bf16.mxu0 0
    %877 = vmatpush1.bf16.msra.mxu0 0
    %878 = vmatprep.subr.bf16.mxu0 0
    %879 = vmatpush1.bf16.msra.mxu0 0
    %880 = vmatprep.subr.bf16.mxu0 0
    %881 = vmatpush1.bf16.msra.mxu0 0
    %882 = vmatprep.subr.bf16.mxu0 0
    %883 = vmatpush1.bf16.msra.mxu0 0
    %884 = vmatprep.subr.bf16.mxu0 0
    %885 = vmatpush1.bf16.msra.mxu0 0
    %886 = vmatprep.subr.bf16.mxu0 0
    %887 = vmatpush1.bf16.msra.mxu0 0
    %888 = vmatprep.subr.bf16.mxu0 0
    %889 = vmatpush1.bf16.msra.mxu0 0
    %890 = vmatprep.subr.bf16.mxu0 0
    %891 = vmatpush1.bf16.msra.mxu0 0
    %892 = vmatprep.mubr.bf16.mxu0 0
    %893 = vmatmul.mubr.bf16.gmra.mrb[0].mxu0 %v855
    %v894 = vpop.f32.mrb[0].mxu0
    %v895 = vadd.f32 0.0, %v894
    %v896 = vpop.f32.mrb[0].mxu0
    %v897 = vpop.f32.mrb[0].mxu0
    %v898 = vpop.f32.mrb[0].mxu0
    %899 = vdwg.mxu0
    %900 = vrot.lane.b32.xlu0 %v163, 48
    %v901 = vpop.permute.xlu0 %900
    %v903 = vsel %vm166, %v851, 0
    %v906 = vsel %vm296, %v901, 0
    %908 = vmatprep.subr.bf16.mxu0 0
    %909 = vmatpush1.bf16.msra.mxu0 %v906
    %910 = vmatprep.subr.bf16.mxu0 0
    %911 = vmatpush1.bf16.msra.mxu0 0
    %912 = vmatprep.subr.bf16.mxu0 0
    %913 = vmatpush1.bf16.msra.mxu0 0
    %914 = vmatprep.subr.bf16.mxu0 0
    %915 = vmatpush1.bf16.msra.mxu0 0
    %916 = vmatprep.subr.bf16.mxu0 0
    %917 = vmatpush1.bf16.msra.mxu0 0
    %918 = vmatprep.subr.bf16.mxu0 0
    %919 = vmatpush1.bf16.msra.mxu0 0
    %920 = vmatprep.subr.bf16.mxu0 0
    %921 = vmatpush1.bf16.msra.mxu0 0
    %922 = vmatprep.subr.bf16.mxu0 0
    %923 = vmatpush1.bf16.msra.mxu0 0
    %924 = vmatprep.subr.bf16.mxu0 0
    %925 = vmatpush1.bf16.msra.mxu0 0
    %926 = vmatprep.subr.bf16.mxu0 0
    %927 = vmatpush1.bf16.msra.mxu0 0
    %928 = vmatprep.subr.bf16.mxu0 0
    %929 = vmatpush1.bf16.msra.mxu0 0
    %930 = vmatprep.subr.bf16.mxu0 0
    %931 = vmatpush1.bf16.msra.mxu0 0
    %932 = vmatprep.subr.bf16.mxu0 0
    %933 = vmatpush1.bf16.msra.mxu0 0
    %934 = vmatprep.subr.bf16.mxu0 0
    %935 = vmatpush1.bf16.msra.mxu0 0
    %936 = vmatprep.subr.bf16.mxu0 0
    %937 = vmatpush1.bf16.msra.mxu0 0
    %938 = vmatprep.subr.bf16.mxu0 0
    %939 = vmatpush1.bf16.msra.mxu0 0
    %940 = vmatprep.mubr.bf16.mxu0 0
    %941 = vmatmul.mubr.bf16.gmra.mrb[0].mxu0 %v903
    %v942 = vpop.f32.mrb[0].mxu0
    %v943 = vadd.f32 0.0, %v942
    %v944 = vpop.f32.mrb[0].mxu0
    %v945 = vpop.f32.mrb[0].mxu0
    %v946 = vpop.f32.mrb[0].mxu0
    %947 = vdwg.mxu0
    %v948 = vpack.c.bf16 %v943, %v895
    %v949 = vld [vmem:[#allocation7 + $0x10] sm:$0xf]
    %v951 = vunpack.c.l.b16 %v949
    %v952 = vpack.c.b16 %v951, %v951
    %953 = vrot.lane.b32.xlu0 %v952, 32
    %v954 = vpop.permute.xlu0 %953
    %v956 = vsel %vm166, %v948, 0
    %v959 = vsel %vm296, %v954, 0
    %961 = vmatprep.subr.bf16.mxu0 0
    %962 = vmatpush1.bf16.msra.mxu0 %v959
    %963 = vmatprep.subr.bf16.mxu0 0
    %964 = vmatpush1.bf16.msra.mxu0 0
    %965 = vmatprep.subr.bf16.mxu0 0
    %966 = vmatpush1.bf16.msra.mxu0 0
    %967 = vmatprep.subr.bf16.mxu0 0
    %968 = vmatpush1.bf16.msra.mxu0 0
    %969 = vmatprep.subr.bf16.mxu0 0
    %970 = vmatpush1.bf16.msra.mxu0 0
    %971 = vmatprep.subr.bf16.mxu0 0
    %972 = vmatpush1.bf16.msra.mxu0 0
    %973 = vmatprep.subr.bf16.mxu0 0
    %974 = vmatpush1.bf16.msra.mxu0 0
    %975 = vmatprep.subr.bf16.mxu0 0
    %976 = vmatpush1.bf16.msra.mxu0 0
    %977 = vmatprep.subr.bf16.mxu0 0
    %978 = vmatpush1.bf16.msra.mxu0 0
    %979 = vmatprep.subr.bf16.mxu0 0
    %980 = vmatpush1.bf16.msra.mxu0 0
    %981 = vmatprep.subr.bf16.mxu0 0
    %982 = vmatpush1.bf16.msra.mxu0 0
    %983 = vmatprep.subr.bf16.mxu0 0
    %984 = vmatpush1.bf16.msra.mxu0 0
    %985 = vmatprep.subr.bf16.mxu0 0
    %986 = vmatpush1.bf16.msra.mxu0 0
    %987 = vmatprep.subr.bf16.mxu0 0
    %988 = vmatpush1.bf16.msra.mxu0 0
    %989 = vmatprep.subr.bf16.mxu0 0
    %990 = vmatpush1.bf16.msra.mxu0 0
    %991 = vmatprep.subr.bf16.mxu0 0
    %992 = vmatpush1.bf16.msra.mxu0 0
    %993 = vmatprep.mubr.bf16.mxu0 0
    %994 = vmatmul.mubr.bf16.gmra.mrb[0].mxu0 %v956
    %v995 = vpop.f32.mrb[0].mxu0
    %v996 = vadd.f32 0.0, %v995
    %v997 = vpop.f32.mrb[0].mxu0
    %v998 = vpop.f32.mrb[0].mxu0
    %v999 = vadd.f32 0.0, %v998
    %v1000 = vpop.f32.mrb[0].mxu0
    %1001 = vdwg.mxu0
    %v1002 = vadd.f32 %v716, %v996
    %v1003 = vadd.f32 %v719, %v999
    %1004 = vrot.lane.b32.xlu0 %v162, 104
    %v1005 = vpop.permute.xlu0 %1004
    %1006 = vrot.lane.b32.xlu0 %v162, 72
    %v1007 = vpop.permute.xlu0 %1006
    %v1009 = vsel %vm166, %v1005, 0
    %v1012 = vsel %vm166, %v1007, 0
    %1014 = vmatprep.subr.bf16.mxu0 0
    %1015 = vmatpush1.bf16.xpose.msra.mxu0 %v1012
    %1016 = vmatprep.subr.bf16.mxu0 0
    %1017 = vmatpush1.bf16.xpose.msra.mxu0 0
    %1018 = vmatprep.subr.bf16.mxu0 0
    %1019 = vmatpush1.bf16.xpose.msra.mxu0 0
    %1020 = vmatprep.subr.bf16.mxu0 0
    %1021 = vmatpush1.bf16.xpose.msra.mxu0 0
    %1022 = vmatprep.subr.bf16.mxu0 0
    %1023 = vmatpush1.bf16.xpose.msra.mxu0 0
    %1024 = vmatprep.subr.bf16.mxu0 0
    %1025 = vmatpush1.bf16.xpose.msra.mxu0 0
    %1026 = vmatprep.subr.bf16.mxu0 0
    %1027 = vmatpush1.bf16.xpose.msra.mxu0 0
    %1028 = vmatprep.subr.bf16.mxu0 0
    %1029 = vmatpush1.bf16.xpose.msra.mxu0 0
    %1030 = vmatprep.subr.bf16.mxu0 0
    %1031 = vmatpush1.bf16.xpose.msra.mxu0 0
    %1032 = vmatprep.subr.bf16.mxu0 0
    %1033 = vmatpush1.bf16.xpose.msra.mxu0 0
    %1034 = vmatprep.subr.bf16.mxu0 0
    %1035 = vmatpush1.bf16.xpose.msra.mxu0 0
    %1036 = vmatprep.subr.bf16.mxu0 0
    %1037 = vmatpush1.bf16.xpose.msra.mxu0 0
    %1038 = vmatprep.subr.bf16.mxu0 0
    %1039 = vmatpush1.bf16.xpose.msra.mxu0 0
    %1040 = vmatprep.subr.bf16.mxu0 0
    %1041 = vmatpush1.bf16.xpose.msra.mxu0 0
    %1042 = vmatprep.subr.bf16.mxu0 0
    %1043 = vmatpush1.bf16.xpose.msra.mxu0 0
    %1044 = vmatprep.subr.bf16.mxu0 0
    %1045 = vmatpush1.bf16.xpose.msra.mxu0 0
    %1046 = vmatprep.mubr.bf16.mxu0 0
    %1047 = vmatmul.mubr.bf16.gmra.mrb[0].mxu0 %v1009
    %v1048 = vpop.f32.mrb[0].mxu0
    %v1049 = vadd.f32 0.0, %v1048
    %v1050 = vpop.f32.mrb[0].mxu0
    %v1051 = vpop.f32.mrb[0].mxu0
    %v1052 = vpop.f32.mrb[0].mxu0
    %1053 = vdwg.mxu0
    %1054 = vrot.lane.b32.xlu0 %v163, 104
    %v1055 = vpop.permute.xlu0 %1054
    %1056 = vrot.lane.b32.xlu0 %v163, 72
    %v1057 = vpop.permute.xlu0 %1056
    %v1059 = vsel %vm166, %v1055, 0
    %v1062 = vsel %vm166, %v1057, 0
    %1064 = vmatprep.subr.bf16.mxu0 0
    %1065 = vmatpush1.bf16.xpose.msra.mxu0 %v1062
    %1066 = vmatprep.subr.bf16.mxu0 0
    %1067 = vmatpush1.bf16.xpose.msra.mxu0 0
    %1068 = vmatprep.subr.bf16.mxu0 0
    %1069 = vmatpush1.bf16.xpose.msra.mxu0 0
    %1070 = vmatprep.subr.bf16.mxu0 0
    %1071 = vmatpush1.bf16.xpose.msra.mxu0 0
    %1072 = vmatprep.subr.bf16.mxu0 0
    %1073 = vmatpush1.bf16.xpose.msra.mxu0 0
    %1074 = vmatprep.subr.bf16.mxu0 0
    %1075 = vmatpush1.bf16.xpose.msra.mxu0 0
    %1076 = vmatprep.subr.bf16.mxu0 0
    %1077 = vmatpush1.bf16.xpose.msra.mxu0 0
    %1078 = vmatprep.subr.bf16.mxu0 0
    %1079 = vmatpush1.bf16.xpose.msra.mxu0 0
    %1080 = vmatprep.subr.bf16.mxu0 0
    %1081 = vmatpush1.bf16.xpose.msra.mxu0 0
    %1082 = vmatprep.subr.bf16.mxu0 0
    %1083 = vmatpush1.bf16.xpose.msra.mxu0 0
    %1084 = vmatprep.subr.bf16.mxu0 0
    %1085 = vmatpush1.bf16.xpose.msra.mxu0 0
    %1086 = vmatprep.subr.bf16.mxu0 0
    %1087 = vmatpush1.bf16.xpose.msra.mxu0 0
    %1088 = vmatprep.subr.bf16.mxu0 0
    %1089 = vmatpush1.bf16.xpose.msra.mxu0 0
    %1090 = vmatprep.subr.bf16.mxu0 0
    %1091 = vmatpush1.bf16.xpose.msra.mxu0 0
    %1092 = vmatprep.subr.bf16.mxu0 0
    %1093 = vmatpush1.bf16.xpose.msra.mxu0 0
    %1094 = vmatprep.subr.bf16.mxu0 0
    %1095 = vmatpush1.bf16.xpose.msra.mxu0 0
    %1096 = vmatprep.mubr.bf16.mxu0 0
    %1097 = vmatmul.mubr.bf16.gmra.mrb[0].mxu0 %v1059
    %v1098 = vpop.f32.mrb[0].mxu0
    %v1099 = vadd.f32 0.0, %v1098
    %v1100 = vpop.f32.mrb[0].mxu0
    %v1101 = vpop.f32.mrb[0].mxu0
    %v1102 = vpop.f32.mrb[0].mxu0
    %1103 = vdwg.mxu0
    %v1104 = vmul.f32 %v1049, 0.35355338
    %v1105 = vmul.f32 %v1099, 0.35355338
    %v1106 = vadd.f32 %v1104, %v72
    %v1107 = vadd.f32 %v1105, %v76
    %v1108 = vsel %vm166, %v1106, -inf
    %1109 = vmax.xlane.f32.xlu0 %v1108
    %v1110 = vpop.xlane.xlu0 %1109
    %v1111 = vsel %vm166, %v1107, -inf
    %1112 = vmax.xlane.f32.xlu0 %v1111
    %v1113 = vpop.xlane.xlu0 %1112
    %v1114 = vsub.f32 %v1106, %v1110
    %v1115 = vsub.f32 %v1107, %v1113
    %v1116 = vmul.f32 %v1114, 1.442695
    %v1117 = vpow.pop %v1116
    %v1118 = vmul.f32 %v1115, 1.442695
    %v1119 = vpow.pop %v1118
    %v1120 = vsel %vm166, %v1117, 0.0
    %1121 = vadd.xlane.f32.xlu0 %v1120
    %v1122 = vpop.xlane.xlu0 %1121
    %v1123 = vsel %vm166, %v1119, 0.0
    %1124 = vadd.xlane.f32.xlu0 %v1123
    %v1125 = vpop.xlane.xlu0 %1124
    %v1126 = vrcp.pop %v1122
    %v1127 = vrcp.pop %v1125
    %v1128 = vmul.f32 %v1117, %v1126
    %v1129 = vmul.f32 %v1119, %v1127
    %v1130 = vmul.f32 %v1128, %v84
    %v1131 = vmul.f32 %v1129, %v88
    %v1132 = vpack.c.bf16 %v1130, %v1130
    %v1133 = vpack.c.bf16 %v1131, %v1131
    %1134 = vrot.lane.b32.xlu0 %v162, 40
    %v1135 = vpop.permute.xlu0 %1134
    %v1137 = vsel %vm166, %v1132, 0
    %v1140 = vsel %vm296, %v1135, 0
    %1142 = vmatprep.subr.bf16.mxu0 0
    %1143 = vmatpush1.bf16.msra.mxu0 %v1140
    %1144 = vmatprep.subr.bf16.mxu0 0
    %1145 = vmatpush1.bf16.msra.mxu0 0
    %1146 = vmatprep.subr.bf16.mxu0 0
    %1147 = vmatpush1.bf16.msra.mxu0 0
    %1148 = vmatprep.subr.bf16.mxu0 0
    %1149 = vmatpush1.bf16.msra.mxu0 0
    %1150 = vmatprep.subr.bf16.mxu0 0
    %1151 = vmatpush1.bf16.msra.mxu0 0
    %1152 = vmatprep.subr.bf16.mxu0 0
    %1153 = vmatpush1.bf16.msra.mxu0 0
    %1154 = vmatprep.subr.bf16.mxu0 0
    %1155 = vmatpush1.bf16.msra.mxu0 0
    %1156 = vmatprep.subr.bf16.mxu0 0
    %1157 = vmatpush1.bf16.msra.mxu0 0
    %1158 = vmatprep.subr.bf16.mxu0 0
    %1159 = vmatpush1.bf16.msra.mxu0 0
    %1160 = vmatprep.subr.bf16.mxu0 0
    %1161 = vmatpush1.bf16.msra.mxu0 0
    %1162 = vmatprep.subr.bf16.mxu0 0
    %1163 = vmatpush1.bf16.msra.mxu0 0
    %1164 = vmatprep.subr.bf16.mxu0 0
    %1165 = vmatpush1.bf16.msra.mxu0 0
    %1166 = vmatprep.subr.bf16.mxu0 0
    %1167 = vmatpush1.bf16.msra.mxu0 0
    %1168 = vmatprep.subr.bf16.mxu0 0
    %1169 = vmatpush1.bf16.msra.mxu0 0
    %1170 = vmatprep.subr.bf16.mxu0 0
    %1171 = vmatpush1.bf16.msra.mxu0 0
    %1172 = vmatprep.subr.bf16.mxu0 0
    %1173 = vmatpush1.bf16.msra.mxu0 0
    %1174 = vmatprep.mubr.bf16.mxu0 0
    %1175 = vmatmul.mubr.bf16.gmra.mrb[0].mxu0 %v1137
    %v1176 = vpop.f32.mrb[0].mxu0
    %v1177 = vadd.f32 0.0, %v1176
    %v1178 = vpop.f32.mrb[0].mxu0
    %v1179 = vpop.f32.mrb[0].mxu0
    %v1180 = vpop.f32.mrb[0].mxu0
    %1181 = vdwg.mxu0
    %1182 = vrot.lane.b32.xlu0 %v163, 40
    %v1183 = vpop.permute.xlu0 %1182
    %v1185 = vsel %vm166, %v1133, 0
    %v1188 = vsel %vm296, %v1183, 0
    %1190 = vmatprep.subr.bf16.mxu0 0
    %1191 = vmatpush1.bf16.msra.mxu0 %v1188
    %1192 = vmatprep.subr.bf16.mxu0 0
    %1193 = vmatpush1.bf16.msra.mxu0 0
    %1194 = vmatprep.subr.bf16.mxu0 0
    %1195 = vmatpush1.bf16.msra.mxu0 0
    %1196 = vmatprep.subr.bf16.mxu0 0
    %1197 = vmatpush1.bf16.msra.mxu0 0
    %1198 = vmatprep.subr.bf16.mxu0 0
    %1199 = vmatpush1.bf16.msra.mxu0 0
    %1200 = vmatprep.subr.bf16.mxu0 0
    %1201 = vmatpush1.bf16.msra.mxu0 0
    %1202 = vmatprep.subr.bf16.mxu0 0
    %1203 = vmatpush1.bf16.msra.mxu0 0
    %1204 = vmatprep.subr.bf16.mxu0 0
    %1205 = vmatpush1.bf16.msra.mxu0 0
    %1206 = vmatprep.subr.bf16.mxu0 0
    %1207 = vmatpush1.bf16.msra.mxu0 0
    %1208 = vmatprep.subr.bf16.mxu0 0
    %1209 = vmatpush1.bf16.msra.mxu0 0
    %1210 = vmatprep.subr.bf16.mxu0 0
    %1211 = vmatpush1.bf16.msra.mxu0 0
    %1212 = vmatprep.subr.bf16.mxu0 0
    %1213 = vmatpush1.bf16.msra.mxu0 0
    %1214 = vmatprep.subr.bf16.mxu0 0
    %1215 = vmatpush1.bf16.msra.mxu0 0
    %1216 = vmatprep.subr.bf16.mxu0 0
    %1217 = vmatpush1.bf16.msra.mxu0 0
    %1218 = vmatprep.subr.bf16.mxu0 0
    %1219 = vmatpush1.bf16.msra.mxu0 0
    %1220 = vmatprep.subr.bf16.mxu0 0
    %1221 = vmatpush1.bf16.msra.mxu0 0
    %1222 = vmatprep.mubr.bf16.mxu0 0
    %1223 = vmatmul.mubr.bf16.gmra.mrb[0].mxu0 %v1185
    %v1224 = vpop.f32.mrb[0].mxu0
    %v1225 = vadd.f32 0.0, %v1224
    %v1226 = vpop.f32.mrb[0].mxu0
    %v1227 = vpop.f32.mrb[0].mxu0
    %v1228 = vpop.f32.mrb[0].mxu0
    %1229 = vdwg.mxu0
    %v1230 = vpack.c.bf16 %v1225, %v1177
    %v1231 = vld [vmem:[#allocation7 + $0x18] sm:$0xf]
    %v1233 = vunpack.c.l.b16 %v1231
    %v1234 = vpack.c.b16 %v1233, %v1233
    %1235 = vrot.lane.b32.xlu0 %v1234, 32
    %v1236 = vpop.permute.xlu0 %1235
    %v1238 = vsel %vm166, %v1230, 0
    %v1241 = vsel %vm296, %v1236, 0
    %1243 = vmatprep.subr.bf16.mxu0 0
    %1244 = vmatpush1.bf16.msra.mxu0 %v1241
    %1245 = vmatprep.subr.bf16.mxu0 0
    %1246 = vmatpush1.bf16.msra.mxu0 0
    %1247 = vmatprep.subr.bf16.mxu0 0
    %1248 = vmatpush1.bf16.msra.mxu0 0
    %1249 = vmatprep.subr.bf16.mxu0 0
    %1250 = vmatpush1.bf16.msra.mxu0 0
    %1251 = vmatprep.subr.bf16.mxu0 0
    %1252 = vmatpush1.bf16.msra.mxu0 0
    %1253 = vmatprep.subr.bf16.mxu0 0
    %1254 = vmatpush1.bf16.msra.mxu0 0
    %1255 = vmatprep.subr.bf16.mxu0 0
    %1256 = vmatpush1.bf16.msra.mxu0 0
    %1257 = vmatprep.subr.bf16.mxu0 0
    %1258 = vmatpush1.bf16.msra.mxu0 0
    %1259 = vmatprep.subr.bf16.mxu0 0
    %1260 = vmatpush1.bf16.msra.mxu0 0
    %1261 = vmatprep.subr.bf16.mxu0 0
    %1262 = vmatpush1.bf16.msra.mxu0 0
    %1263 = vmatprep.subr.bf16.mxu0 0
    %1264 = vmatpush1.bf16.msra.mxu0 0
    %1265 = vmatprep.subr.bf16.mxu0 0
    %1266 = vmatpush1.bf16.msra.mxu0 0
    %1267 = vmatprep.subr.bf16.mxu0 0
    %1268 = vmatpush1.bf16.msra.mxu0 0
    %1269 = vmatprep.subr.bf16.mxu0 0
    %1270 = vmatpush1.bf16.msra.mxu0 0
    %1271 = vmatprep.subr.bf16.mxu0 0
    %1272 = vmatpush1.bf16.msra.mxu0 0
    %1273 = vmatprep.subr.bf16.mxu0 0
    %1274 = vmatpush1.bf16.msra.mxu0 0
    %1275 = vmatprep.mubr.bf16.mxu0 0
    %1276 = vmatmul.mubr.bf16.gmra.mrb[0].mxu0 %v1238
    %v1277 = vpop.f32.mrb[0].mxu0
    %v1278 = vadd.f32 0.0, %v1277
    %v1279 = vpop.f32.mrb[0].mxu0
    %v1280 = vpop.f32.mrb[0].mxu0
    %v1281 = vadd.f32 0.0, %v1280
    %v1282 = vpop.f32.mrb[0].mxu0
    %1283 = vdwg.mxu0
    %v1284 = vadd.f32 %v1002, %v1278
    %v1285 = vadd.f32 %v1003, %v1281
    %v1286 = vadd.f32 %v60, %v1284
    %v1287 = vadd.f32 %v61, %v1285
    %v1288 = vlaneseq
    %v1289 = vshrl.u32 %v1288, 7
    %v1290 = vsub.s32 1, %v1289
    %v1291 = vrot.slane %v91, %v1290
    %v1292 = vadd.f32 %v1286, %v1291
    %v1293 = vadd.f32 %v1287, %v1291
    %v1294 = vsel %vm113, %v1292, 0.0
    %1295 = vadd.xlane.f32.xlu0 %v1294
    %v1296 = vpop.xlane.xlu0 %1295
    %v1297 = vsel %vm113, %v1293, 0.0
    %1298 = vadd.xlane.f32.xlu0 %v1297
    %v1299 = vpop.xlane.xlu0 %1298
    %v1300 = vrcp.pop 32.0
    %v1301 = vmul.f32 %v1296, %v1300
    %v1302 = vmul.f32 %v1299, %v1300
    %v1303 = vsub.f32 %v1292, %v1301
    %v1304 = vsub.f32 %v1293, %v1302
    %v1305 = vmul.f32 %v1303, %v1303
    %v1306 = vmul.f32 %v1304, %v1304
    %v1307 = vsel %vm113, %v1305, 0.0
    %1308 = vadd.xlane.f32.xlu0 %v1307
    %v1309 = vpop.xlane.xlu0 %1308
    %v1310 = vsel %vm113, %v1306, 0.0
    %1311 = vadd.xlane.f32.xlu0 %v1310
    %v1312 = vpop.xlane.xlu0 %1311
    %v1313 = vmul.f32 %v1309, %v1300
    %v1314 = vmul.f32 %v1312, %v1300
    %v1315 = vadd.f32 %v1313, 1e-05
    %v1316 = vadd.f32 %v1314, 1e-05
    %v1317 = vrsqrt.pop %v1315
    %v1318 = vrsqrt.pop %v1316
    %v1319 = vmul.f32 %v1303, %v1317
    %v1320 = vmul.f32 %v1304, %v1318
    %v1321 = vlaneseq
    %v1322 = vshrl.u32 %v1321, 7
    %v1323 = vsub.s32 2, %v1322
    %v1324 = vrot.slane %v91, %v1323
    %v1325 = vmul.f32 %v1319, %v1324
    %v1326 = vmul.f32 %v1320, %v1324
    %v1327 = vlaneseq
    %v1328 = vshrl.u32 %v1327, 7
    %v1329 = vsub.s32 3, %v1328
    %v1330 = vrot.slane %v91, %v1329
    %v1331 = vadd.f32 %v1325, %v1330
    %v1332 = vadd.f32 %v1326, %v1330
    %v1333 = vpack.c.bf16 %v1332, %v1331
    %v1334 = vld [vmem:[#allocation7 + $0x4] sm:$0xf]
    %v1335 = vld [vmem:[#allocation7 + $0xc] sm:$0xf]
    %v1336 = vld [vmem:[#allocation7 + $0x14] sm:$0xf]
    %v1337 = vld [vmem:[#allocation7 + $0x1c] sm:$0xf]
    %v1338 = vlaneseq
    %v1339 = vshrl.u32 %v1338, 7
    %v1340 = vsub.s32 4, %v1339
    %v1341 = vrot.slane %v91, %v1340
    %v1346 = vunpack.c.l.b16 %v1334
    %v1347 = vunpack.c.l.b16 %v1335
    %v1348 = vunpack.c.l.b16 %v1336
    %v1349 = vunpack.c.l.b16 %v1337
    %v1350 = vpack.c.b16 %v1347, %v1346
    %v1351 = vpack.c.b16 %v1349, %v1348
    %v1355 = vsel %vm113, %v1333, 0
    %1357 = vmatprep.subr.bf16.mxu0 0
    %1358 = vmatpush1.bf16.msra.mxu0 %v1350
    %1359 = vmatprep.subr.bf16.mxu0 0
    %1360 = vmatpush1.bf16.msra.mxu0 %v1351
    %1361 = vmatprep.subr.bf16.mxu0 0
    %1362 = vmatpush1.bf16.msra.mxu0 0
    %1363 = vmatprep.subr.bf16.mxu0 0
    %1364 = vmatpush1.bf16.msra.mxu0 0
    %1365 = vmatprep.subr.bf16.mxu0 0
    %1366 = vmatpush1.bf16.msra.mxu0 0
    %1367 = vmatprep.subr.bf16.mxu0 0
    %1368 = vmatpush1.bf16.msra.mxu0 0
    %1369 = vmatprep.subr.bf16.mxu0 0
    %1370 = vmatpush1.bf16.msra.mxu0 0
    %1371 = vmatprep.subr.bf16.mxu0 0
    %1372 = vmatpush1.bf16.msra.mxu0 0
    %1373 = vmatprep.subr.bf16.mxu0 0
    %1374 = vmatpush1.bf16.msra.mxu0 0
    %1375 = vmatprep.subr.bf16.mxu0 0
    %1376 = vmatpush1.bf16.msra.mxu0 0
    %1377 = vmatprep.subr.bf16.mxu0 0
    %1378 = vmatpush1.bf16.msra.mxu0 0
    %1379 = vmatprep.subr.bf16.mxu0 0
    %1380 = vmatpush1.bf16.msra.mxu0 0
    %1381 = vmatprep.subr.bf16.mxu0 0
    %1382 = vmatpush1.bf16.msra.mxu0 0
    %1383 = vmatprep.subr.bf16.mxu0 0
    %1384 = vmatpush1.bf16.msra.mxu0 0
    %1385 = vmatprep.subr.bf16.mxu0 0
    %1386 = vmatpush1.bf16.msra.mxu0 0
    %1387 = vmatprep.subr.bf16.mxu0 0
    %1388 = vmatpush1.bf16.msra.mxu0 0
    %1389 = vmatprep.mubr.bf16.mxu0 0
    %1390 = vmatmul.mubr.bf16.gmra.mrb[0].mxu0 %v1355
    %v1391 = vpop.f32.mrb[0].mxu0
    %v1392 = vadd.f32 %v1341, %v1391
    %v1393 = vpop.f32.mrb[0].mxu0
    %v1394 = vpop.f32.mrb[0].mxu0
    %v1395 = vadd.f32 %v1341, %v1394
    %v1396 = vpop.f32.mrb[0].mxu0
    %1397 = vdwg.mxu0
    %v1398 = vmax.f32 %v1392, 0.0
    %v1399 = vmax.f32 %v1395, 0.0
    %v1400 = vpack.c.bf16 %v1399, %v1398
    %1402 = vrot.lane.b32.xlu0 %v1400, 96
    %v1403 = vpop.permute.xlu0 %1402
    %1404 = vrot.lane.b32.xlu0 %v1350, 32
    %v1405 = vpop.permute.xlu0 %1404
    %1406 = vrot.lane.b32.xlu0 %v1351, 32
    %v1407 = vpop.permute.xlu0 %1406
    %v1411 = vsel %vm113, %v1403, 0
    %1413 = vmatprep.subr.bf16.mxu0 0
    %1414 = vmatpush1.bf16.msra.mxu0 %v1405
    %1415 = vmatprep.subr.bf16.mxu0 0
    %1416 = vmatpush1.bf16.msra.mxu0 %v1407
    %1417 = vmatprep.subr.bf16.mxu0 0
    %1418 = vmatpush1.bf16.msra.mxu0 0
    %1419 = vmatprep.subr.bf16.mxu0 0
    %1420 = vmatpush1.bf16.msra.mxu0 0
    %1421 = vmatprep.subr.bf16.mxu0 0
    %1422 = vmatpush1.bf16.msra.mxu0 0
    %1423 = vmatprep.subr.bf16.mxu0 0
    %1424 = vmatpush1.bf16.msra.mxu0 0
    %1425 = vmatprep.subr.bf16.mxu0 0
    %1426 = vmatpush1.bf16.msra.mxu0 0
    %1427 = vmatprep.subr.bf16.mxu0 0
    %1428 = vmatpush1.bf16.msra.mxu0 0
    %1429 = vmatprep.subr.bf16.mxu0 0
    %1430 = vmatpush1.bf16.msra.mxu0 0
    %1431 = vmatprep.subr.bf16.mxu0 0
    %1432 = vmatpush1.bf16.msra.mxu0 0
    %1433 = vmatprep.subr.bf16.mxu0 0
    %1434 = vmatpush1.bf16.msra.mxu0 0
    %1435 = vmatprep.subr.bf16.mxu0 0
    %1436 = vmatpush1.bf16.msra.mxu0 0
    %1437 = vmatprep.subr.bf16.mxu0 0
    %1438 = vmatpush1.bf16.msra.mxu0 0
    %1439 = vmatprep.subr.bf16.mxu0 0
    %1440 = vmatpush1.bf16.msra.mxu0 0
    %1441 = vmatprep.subr.bf16.mxu0 0
    %1442 = vmatpush1.bf16.msra.mxu0 0
    %1443 = vmatprep.subr.bf16.mxu0 0
    %1444 = vmatpush1.bf16.msra.mxu0 0
    %1445 = vmatprep.mubr.bf16.mxu0 0
    %1446 = vmatmul.mubr.bf16.gmra.mrb[0].mxu0 %v1411
    %v1447 = vpop.f32.mrb[0].mxu0
    %v1448 = vadd.f32 0.0, %v1447
    %v1449 = vpop.f32.mrb[0].mxu0
    %v1450 = vpop.f32.mrb[0].mxu0
    %v1451 = vadd.f32 0.0, %v1450
    %v1452 = vpop.f32.mrb[0].mxu0
    %1453 = vdwg.mxu0
    %1454 = vrot.lane.b32.xlu0 %v1350, 64
    %v1455 = vpop.permute.xlu0 %1454
    %1456 = vrot.lane.b32.xlu0 %v1351, 64
    %v1457 = vpop.permute.xlu0 %1456
    %v1461 = vsel %vm113, %v1400, 0
    %1463 = vmatprep.subr.bf16.mxu0 0
    %1464 = vmatpush1.bf16.msra.mxu0 %v1455
    %1465 = vmatprep.subr.bf16.mxu0 0
    %1466 = vmatpush1.bf16.msra.mxu0 %v1457
    %1467 = vmatprep.subr.bf16.mxu0 0
    %1468 = vmatpush1.bf16.msra.mxu0 0
    %1469 = vmatprep.subr.bf16.mxu0 0
    %1470 = vmatpush1.bf16.msra.mxu0 0
    %1471 = vmatprep.subr.bf16.mxu0 0
    %1472 = vmatpush1.bf16.msra.mxu0 0
    %1473 = vmatprep.subr.bf16.mxu0 0
    %1474 = vmatpush1.bf16.msra.mxu0 0
    %1475 = vmatprep.subr.bf16.mxu0 0
    %1476 = vmatpush1.bf16.msra.mxu0 0
    %1477 = vmatprep.subr.bf16.mxu0 0
    %1478 = vmatpush1.bf16.msra.mxu0 0
    %1479 = vmatprep.subr.bf16.mxu0 0
    %1480 = vmatpush1.bf16.msra.mxu0 0
    %1481 = vmatprep.subr.bf16.mxu0 0
    %1482 = vmatpush1.bf16.msra.mxu0 0
    %1483 = vmatprep.subr.bf16.mxu0 0
    %1484 = vmatpush1.bf16.msra.mxu0 0
    %1485 = vmatprep.subr.bf16.mxu0 0
    %1486 = vmatpush1.bf16.msra.mxu0 0
    %1487 = vmatprep.subr.bf16.mxu0 0
    %1488 = vmatpush1.bf16.msra.mxu0 0
    %1489 = vmatprep.subr.bf16.mxu0 0
    %1490 = vmatpush1.bf16.msra.mxu0 0
    %1491 = vmatprep.subr.bf16.mxu0 0
    %1492 = vmatpush1.bf16.msra.mxu0 0
    %1493 = vmatprep.subr.bf16.mxu0 0
    %1494 = vmatpush1.bf16.msra.mxu0 0
    %1495 = vmatprep.mubr.bf16.mxu0 0
    %1496 = vmatmul.mubr.bf16.gmra.mrb[0].mxu0 %v1461
    %v1497 = vpop.f32.mrb[0].mxu0
    %v1498 = vadd.f32 %v1448, %v1497
    %v1499 = vpop.f32.mrb[0].mxu0
    %v1500 = vpop.f32.mrb[0].mxu0
    %v1501 = vadd.f32 %v1451, %v1500
    %v1502 = vpop.f32.mrb[0].mxu0
    %1503 = vdwg.mxu0
    %v1504 = vlaneseq
    %v1505 = vshrl.u32 %v1504, 7
    %v1506 = vsub.s32 5, %v1505
    %v1507 = vrot.slane %v91, %v1506
    %v1508 = vadd.f32 %v1498, %v1507
    %v1509 = vadd.f32 %v1501, %v1507
    %v1510 = vadd.f32 %v1331, %v1508
    %v1511 = vadd.f32 %v1332, %v1509
    %v1512 = vsel %vm113, %v1510, 0.0
    %1513 = vadd.xlane.f32.xlu0 %v1512
    %v1514 = vpop.xlane.xlu0 %1513
    %v1515 = vsel %vm113, %v1511, 0.0
    %1516 = vadd.xlane.f32.xlu0 %v1515
    %v1517 = vpop.xlane.xlu0 %1516
    %v1518 = vmul.f32 %v1514, %v1300
    %v1519 = vmul.f32 %v1517, %v1300
    %v1520 = vsub.f32 %v1510, %v1518
    %v1521 = vsub.f32 %v1511, %v1519
    %v1522 = vmul.f32 %v1520, %v1520
    %v1523 = vmul.f32 %v1521, %v1521
    %v1524 = vsel %vm113, %v1522, 0.0
    %1525 = vadd.xlane.f32.xlu0 %v1524
    %v1526 = vpop.xlane.xlu0 %1525
    %v1527 = vsel %vm113, %v1523, 0.0
    %1528 = vadd.xlane.f32.xlu0 %v1527
    %v1529 = vpop.xlane.xlu0 %1528
    %v1530 = vmul.f32 %v1526, %v1300
    %v1531 = vmul.f32 %v1529, %v1300
    %v1532 = vadd.f32 %v1530, 1e-05
    %v1533 = vadd.f32 %v1531, 1e-05
    %v1534 = vrsqrt.pop %v1532
    %v1535 = vrsqrt.pop %v1533
    %v1536 = vmul.f32 %v1520, %v1534
    %v1537 = vmul.f32 %v1521, %v1535
    %v1538 = vlaneseq
    %v1539 = vshrl.u32 %v1538, 7
    %v1540 = vsub.s32 6, %v1539
    %v1541 = vrot.slane %v91, %v1540
    %v1542 = vmul.f32 %v1536, %v1541
    %v1543 = vmul.f32 %v1537, %v1541
    %v1544 = vlaneseq
    %v1545 = vshrl.u32 %v1544, 7
    %v1546 = vsub.s32 7, %v1545
    %v1547 = vrot.slane %v91, %v1546
    %v1548 = vadd.f32 %v1542, %v1547
    %v1549 = vadd.f32 %v1543, %v1547
    %1550 = vst.msk [vmem:[#allocation8] sm:$0xff] %vm113, %v1548
    %1551 = vst.msk [vmem:[#allocation8 + $0x8] sm:$0xff] %vm113, %v1549
    // Predicated region
    $region30: #{tpu_custom_call.1} parent=1 // pred_check
      _
    $region31: #{tpu_custom_call.1} parent=1 // pred_check_branch
      %1553 = sbr.rel (0) target = $region33
    $region32: #{tpu_custom_call.1} parent=1 // pred_region
      %s1555 = ssub.s32 256, 256
      %1556 = vsyncadd [#allocation4], %s1555
      %s1557 = sshll.u32 [#allocation8], 4
      %s1558 = int_to_ptr.vmem [resolvable:$true] %s1557
      %1563 = dma.vmem_to_hbm [thread:$0]  %s1558, 256, %s4, [#allocation4], 128, 128, 8
    $region33: #{tpu_custom_call.1} parent=1 // pred_fallthru
      _
    // Predicated region
    $region34: #{tpu_custom_call.1} parent=1 // pred_check
      _
    $region35: #{tpu_custom_call.1} parent=1 // pred_check_branch
      %1565 = sbr.rel (0) target = $region37
    $region36: #{tpu_custom_call.1} parent=1 // pred_region
      %1566 = dma.done [#allocation4], 256
    $region37: #{tpu_custom_call.1} parent=1 // pred_fallthru
      _
    %1567 = vsyncpa [#allocation3], 1
    %1568 = vsyncpa [#allocation6], 1
    %1569 = vsyncpa [#allocation4], 1

</llo_original>
